<compile_context>
chip_gen: v7x
topology: tpu7x:2x2x1
jax: 0.10.0
libtpu: 0.0.40
codegen_flags: <defaults>
</compile_context>

<pallas_src>
from functools import partial

import jax
import jax.numpy as jnp
from jax.experimental import pallas as pl
from jax.experimental.pallas import tpu as pltpu


# --------------------------------------------------------------------------- #
# Kernels
# --------------------------------------------------------------------------- #
def _hpool_sum(x2d, f_h):
    """H-direction pool: sum the f_h contiguous lane segments on the VPU."""
    if f_h == 1:
        return x2d
    seg = x2d.shape[-1] // f_h
    acc = x2d[..., :seg]
    for s in range(1, f_h):
        acc = acc + x2d[..., s * seg:(s + 1) * seg]
    return acc


def _pool_kernel(x_ref, pm_ref, o_ref, *, f_h):
    """(f x f) mean pool.
    x_ref: (1, C, TH, L_in)   pm_ref: (K, L_out)   o_ref: (1, C, TH, L_out)."""
    _, c, th, l_in = x_ref.shape
    l_out = o_ref.shape[3]
    pm = pm_ref[...]
    if th % 8 == 0:
        # Free leading-dim merge -> one fused MXU dot, one store stream.
        x2d = _hpool_sum(x_ref[...].reshape(c * th, l_in), f_h)
        y = jnp.dot(x2d, pm, preferred_element_type=jnp.float32)
        o_ref[...] = y.reshape(1, c, th, l_out).astype(o_ref.dtype)
    else:
        # Tiny row tiles (hro < sublane multiple): per-channel dots avoid a
        # sublane relayout of the merged view.
        for ci in range(c):
            xc = _hpool_sum(x_ref[0, ci], f_h)
            o_ref[0, ci] = jnp.dot(
                xc, pm, preferred_element_type=jnp.float32).astype(o_ref.dtype)


def _pool_conv_kernel(w_ref, x_ref, pm_ref, o_ref, acc_ref, *, f_h):
    """(f x f) mean pool + 1x1 conv.
    w_ref (SMEM): (C_out, C_in)      x_ref: (1, C_in, TH, L_in)
    pm_ref: (K, L_out)               o_ref: (1, C_out, TH, L_out)
    acc_ref (VMEM f32 scratch): (C_in, TH, L_out)."""
    _, c_in, th, l_in = x_ref.shape
    c_out, l_out = o_ref.shape[1], o_ref.shape[3]
    pm = pm_ref[...]
    if th % 8 == 0:
        x2d = _hpool_sum(x_ref[...].reshape(c_in * th, l_in), f_h)
        acc_ref[...] = jnp.dot(
            x2d, pm, preferred_element_type=jnp.float32).reshape(c_in, th, l_out)
    else:
        for ci in range(c_in):
            xc = _hpool_sum(x_ref[0, ci], f_h)
            acc_ref[ci] = jnp.dot(xc, pm, preferred_element_type=jnp.float32)
    # 1x1 conv: C_out*C_in broadcast FMAs on the VPU, weight scalars in SMEM.
    # Pooled activations are read back from the VMEM scratch slice-by-slice so
    # vreg pressure stays bounded (per perf review).
    # TODO(synk): switch the channel mix to an MXU matmul when C_in/C_out >= 128.
    for co in range(c_out):
        y = w_ref[co, 0] * acc_ref[0]
        for ci in range(1, c_in):
            y = y + w_ref[co, ci] * acc_ref[ci]
        o_ref[0, co] = y.astype(o_ref.dtype)


def _conv1x1_kernel(w_ref, x_ref, o_ref):
    """n_stages == 0 with a channel remap: pure 1x1 conv, no pooling matmul."""
    c_in = x_ref.shape[1]
    c_out = o_ref.shape[1]
    for co in range(c_out):
        y = w_ref[co, 0] * x_ref[0, 0].astype(jnp.float32)
        for ci in range(1, c_in):
            y = y + w_ref[co, ci] * x_ref[0, ci].astype(jnp.float32)
        o_ref[0, co] = y.astype(o_ref.dtype)


# --------------------------------------------------------------------------- #
# Wrapper helpers
# --------------------------------------------------------------------------- #
def _single_buffered_spec(shape, index_map):
    """Constant-index operand (pool matrix): keep a single VMEM buffer."""
    try:
        return pl.BlockSpec(shape, index_map, pipeline_mode=pl.Buffered(1))
    except TypeError:  # older BlockSpec without pipeline_mode support
        return pl.BlockSpec(shape, index_map)


def _pick_tile_rows(hro, n_batch, sub, per_row_bytes, fixed_bytes,
                    budget_bytes=16 * 1024 * 1024):
    """Largest sublane-aligned row tile whose working set fits the budget,
    while keeping >= 4 grid programs when possible (v7x has 2 TensorCores)."""
    if hro <= sub:
        return int(hro)
    avail = max(budget_bytes - fixed_bytes, per_row_bytes * sub)
    th = (avail // per_row_bytes) // sub * sub
    th = int(min(hro, max(sub, th)))
    while th > sub and n_batch * (-(-hro // th)) < 4:
        th = max(sub, ((th // 2) // sub) * sub)
    return int(th)


# --------------------------------------------------------------------------- #
# Public entry point (== SpatialRescaler.forward)
# --------------------------------------------------------------------------- #
def spatial_rescaler(x_nchw, conv_weight=None, *, n_stages=1, multiplier=0.5):
    """SpatialRescaler.forward: n_stages x (bilinear x0.5), then optional 1x1 conv.

    x_nchw: (N, C_in, H, W).  conv_weight: (C_out, C_in, 1, 1) or None.
    """
    # TODO(synk): only method='bilinear' with multiplier=0.5 (the module default)
    # is implemented (other modes / general multipliers need gather-based
    # interpolation weights); conv bias is not supported (module default bias=False).
    assert multiplier == 0.5, "only the default multiplier=0.5 is implemented"
    assert n_stages >= 0
    n, c_in, h, w = x_nchw.shape
    f = 2 ** n_stages
    assert h % f == 0 and w % f == 0, "spatial dims must be divisible by 2**n_stages"
    ho, wo = h // f, w // f
    out_dtype = x_nchw.dtype
    itemsize = jnp.dtype(out_dtype).itemsize
    sub = {4: 8, 2: 16, 1: 32}.get(itemsize, 8)   # packed-sublane multiple
    lane = 128

    if n_stages == 0 and conv_weight is None:
        return x_nchw

    c_out = c_in if conv_weight is None else conv_weight.shape[0]

    # ---- lane packing: put k output rows on the lane axis when wo < 128 -----
    if wo >= lane:
        k = 1
    else:
        k_target = min(ho, -(-lane // wo))
        k = 1
        for cand in range(k_target, 0, -1):
            if ho % cand == 0:
                k = cand
                break
    hro = ho // k            # packed output-row count
    l_out = k * wo           # output lane width (>=128 when possible)
    l_in = k * f * w         # input lane width (k groups of f source rows)

    # Free, contiguous reshape: the k*f source rows of every packed output row
    # land on the lane axis.
    x_r = x_nchw.reshape(n, c_in, hro, l_in)

    # ---- pooling matrix ------------------------------------------------------
    if f > 1:
        if k == 1:
            # Wide images: H-pool is done with (f-1) VPU adds in-kernel; the
            # matmul only does the W-pool -> f x fewer MXU flops, f x smaller pm.
            j = jnp.arange(w)
            pm = jnp.where((j[:, None] // f) == jnp.arange(wo)[None, :],
                           1.0 / (f * f), 0.0).astype(out_dtype)
            f_h = f
        else:
            # Small-W packed case: whole (f x f) pool as one block-diagonal matmul.
            j = jnp.arange(l_in)
            m = jnp.arange(l_out)
            hit = ((j[:, None] // (f * w)) == (m[None, :] // wo)) & \
                  (((j[:, None] % w) // f) == (m[None, :] % wo))
            pm = jnp.where(hit, 1.0 / (f * f), 0.0).astype(out_dtype)
            f_h = 1
    else:
        pm, f_h = None, 1

    # ---- tile / VMEM budgeting ----------------------------------------------
    def pad_lane(l):
        return -(-l // lane) * lane

    def pad_sub(r):
        return -(-r // sub) * sub

    in_row = c_in * pad_lane(l_in) * itemsize
    out_row = c_out * pad_lane(l_out) * itemsize
    scratch_row = c_in * pad_lane(l_out) * 4 if (conv_weight is not None and f > 1) else 0
    per_row = 2 * (in_row + out_row) + scratch_row          # in/out double-buffered
    pm_bytes = 0 if pm is None else pad_sub(pm.shape[0]) * pad_lane(pm.shape[1]) * itemsize

    th = _pick_tile_rows(hro, n, sub, per_row, pm_bytes)
    need = per_row * pad_sub(th) + 2 * pm_bytes + 64 * 1024
    vmem_limit = int(min(64 * 1024 * 1024, max(16 * 1024 * 1024, 2 * need)))

    grid = (n, -(-hro // th))
    x_spec = pl.BlockSpec((1, c_in, th, l_in), lambda ni, hi: (ni, 0, hi, 0))
    out_spec = pl.BlockSpec((1, c_out, th, l_out), lambda ni, hi: (ni, 0, hi, 0))
    out_shape = jax.ShapeDtypeStruct((n, c_out, hro, l_out), out_dtype)

    compiler_params = pltpu.CompilerParams(
        dimension_semantics=("parallel", "parallel"),   # shards across v7x's 2 TCs
        vmem_limit_bytes=vmem_limit,
    )

    # Advisory cost estimate so XLA schedules around the call.
    flops = 0
    if f > 1:
        flops += 2 * n * c_in * hro * pm.shape[0] * l_out        # pool matmul
        flops += n * c_in * hro * (f_h - 1) * (l_in // f_h)      # H-pool VPU adds
    if conv_weight is not None:
        flops += 2 * n * c_out * c_in * ho * wo                  # 1x1 conv FMAs
    bytes_accessed = (x_nchw.size + n * c_out * ho * wo) * itemsize
    if pm is not None:
        bytes_accessed += pm.size * itemsize
    if conv_weight is not None:
        bytes_accessed += c_out * c_in * 4
    cost = pl.CostEstimate(flops=int(flops), transcendentals=0,
                           bytes_accessed=int(bytes_accessed))

    if conv_weight is not None:
        w2d = conv_weight.reshape(c_out, c_in).astype(jnp.float32)
        w_spec = pl.BlockSpec(memory_space=pltpu.MemorySpace.SMEM)
        if f > 1:
            pm_spec = _single_buffered_spec(pm.shape, lambda ni, hi: (0, 0))
            out_p = pl.pallas_call(
                partial(_pool_conv_kernel, f_h=f_h),
                out_shape=out_shape,
                grid=grid,
                in_specs=[w_spec, x_spec, pm_spec],
                out_specs=out_spec,
                scratch_shapes=[pltpu.VMEM((c_in, th, l_out), jnp.float32)],
                compiler_params=compiler_params,
                cost_estimate=cost,
            )(w2d, x_r, pm)
        else:
            # n_stages == 0 with a channel remap: no pooling matmul at all.
            out_p = pl.pallas_call(
                _conv1x1_kernel,
                out_shape=out_shape,
                grid=grid,
                in_specs=[w_spec, x_spec],
                out_specs=out_spec,
                compiler_params=compiler_params,
                cost_estimate=cost,
            )(w2d, x_r)
    else:
        pm_spec = _single_buffered_spec(pm.shape, lambda ni, hi: (0, 0))
        out_p = pl.pallas_call(
            partial(_pool_kernel, f_h=f_h),
            out_shape=out_shape,
            grid=grid,
            in_specs=[x_spec, pm_spec],
            out_specs=out_spec,
            compiler_params=compiler_params,
            cost_estimate=cost,
        )(x_r, pm)

    # Free, contiguous reshape back to NCHW (undoes the lane packing).
    return out_p.reshape(n, c_out, ho, wo)


# --------------------------------------------------------------------------- #
# Self-test
# --------------------------------------------------------------------------- #
if __name__ == "__main__":
    key = jax.random.PRNGKey(0)
    kx, kw, kx3, kw3, kx4, kw4 = jax.random.split(key, 6)

    def ref_pool(x, stages):
        for _ in range(stages):
            n_, c_, h_, w_ = x.shape
            x = x.reshape(n_, c_, h_ // 2, 2, w_ // 2, 2).mean(axis=(3, 5))
        return x

    # 1) SpatialRescaler(n_stages=1, in_channels=4, out_channels=8, bias=False):
    #    small-W path (lane-packed output + block-diagonal pool matmul + 1x1 conv).
    N, C_IN, H, W, C_OUT = 2, 4, 16, 16, 8
    x = jax.random.normal(kx, (N, C_IN, H, W), dtype=jnp.float32)
    conv_w = jax.random.normal(kw, (C_OUT, C_IN, 1, 1), dtype=jnp.float32) * 0.05
    out = jax.block_until_ready(spatial_rescaler(x, conv_w, n_stages=1))
    ref = jnp.einsum("nchw,oc->nohw", ref_pool(x, 1), conv_w[:, :, 0, 0])
    assert out.shape == (N, C_OUT, H // 2, W // 2), out.shape
    assert jnp.allclose(out, ref, atol=1e-5, rtol=1e-5)

    # 2) n_stages=2, no channel remap (pool-only kernel, packed output).
    out2 = jax.block_until_ready(spatial_rescaler(x, None, n_stages=2))
    ref2 = ref_pool(x, 2)
    assert out2.shape == (N, C_IN, H // 4, W // 4), out2.shape
    assert jnp.allclose(out2, ref2, atol=1e-5, rtol=1e-5)

    # 3) Wide-W path (wo >= 128): fused channel matmul + VPU H-pool split + conv.
    x3 = jax.random.normal(kx3, (1, 3, 16, 256), dtype=jnp.float32)
    conv_w3 = jax.random.normal(kw3, (4, 3, 1, 1), dtype=jnp.float32) * 0.05
    out3 = jax.block_until_ready(spatial_rescaler(x3, conv_w3, n_stages=1))
    ref3 = jnp.einsum("nchw,oc->nohw", ref_pool(x3, 1), conv_w3[:, :, 0, 0])
    assert out3.shape == (1, 4, 8, 128), out3.shape
    assert jnp.allclose(out3, ref3, atol=1e-5, rtol=1e-5)

    # 4) n_stages=0 with a channel remap: conv-only kernel (no identity matmul).
    x4 = jax.random.normal(kx4, (1, 4, 8, 32), dtype=jnp.float32)
    conv_w4 = jax.random.normal(kw4, (6, 4, 1, 1), dtype=jnp.float32) * 0.05
    out4 = jax.block_until_ready(spatial_rescaler(x4, conv_w4, n_stages=0))
    ref4 = jnp.einsum("nchw,oc->nohw", x4, conv_w4[:, :, 0, 0])
    assert out4.shape == (1, 6, 8, 32), out4.shape
    assert jnp.allclose(out4, ref4, atol=1e-5, rtol=1e-5)

    print("KERNEL_OK")
</pallas_src>

<mosaic_0001>
module attributes {stable_mosaic.version = 11 : i64} {
  func.func @_pool_conv_kernel(%arg0: i32, %arg1: i32, %arg2: memref<8x4xf32, #tpu.memory_space<smem>>, %arg3: memref<1x4x1x256xf32, #tpu.memory_space<vmem>>, %arg4: memref<256x64xf32, #tpu.memory_space<vmem>>, %arg5: memref<1x8x1x64xf32, #tpu.memory_space<vmem>>, %arg6: memref<4x1x64xf32, #tpu.memory_space<vmem>>) attributes {dimension_semantics = [#tpu.dimension_semantics<parallel>, #tpu.dimension_semantics<parallel>], iteration_bounds = array<i64: 2, 1>, scalar_prefetch = 0 : i64, scratch_operands = 1 : i64, tpu.core_type = #tpu.core_type<tc>, window_params = [{transform_indices = @transform_0, window_bounds = array<i64: 8, 4>}, {transform_indices = @transform_1, window_bounds = array<i64: 1, 4, 1, 256>}, {pipeline_mode = #tpu.pipeline_mode<synchronous>, transform_indices = @transform_2, window_bounds = array<i64: 256, 64>}, {transform_indices = @transform_3, window_bounds = array<i64: 1, 8, 1, 64>}]} {
    %c0 = arith.constant 0 : index
    %c0_0 = arith.constant 0 : index
    %0 = vector.load %arg4[%c0, %c0_0] : memref<256x64xf32, #tpu.memory_space<vmem>>, vector<256x64xf32>
    %c0_1 = arith.constant 0 : index
    %c0_2 = arith.constant 0 : index
    %c0_3 = arith.constant 0 : index
    %c0_4 = arith.constant 0 : index
    %1 = vector.load %arg3[%c0_1, %c0_2, %c0_3, %c0_4] : memref<1x4x1x256xf32, #tpu.memory_space<vmem>>, vector<1x1x1x256xf32>
    %2 = vector.shape_cast %1 : vector<1x1x1x256xf32> to vector<1x256xf32>
    %cst = arith.constant dense<0.000000e+00> : vector<1x64xf32>
    %3 = tpu.matmul %2, %0, %cst {dimension_numbers = #tpu.dot_dimension_numbers<[1], [0], [0], [1], [0, 0, 1, 1], [], []>} : vector<1x256xf32>, vector<256x64xf32>, vector<1x64xf32> -> vector<1x64xf32>
    %c0_5 = arith.constant 0 : index
    %c0_6 = arith.constant 0 : index
    %c0_7 = arith.constant 0 : index
    %4 = vector.load %arg6[%c0_5, %c0_6, %c0_7] : memref<4x1x64xf32, #tpu.memory_space<vmem>>, vector<1x1x64xf32>
    %5 = vector.shape_cast %4 : vector<1x1x64xf32> to vector<1x64xf32>
    %6 = vector.shape_cast %3 : vector<1x64xf32> to vector<1x1x64xf32>
    tpu.vector_store %arg6[%c0_5, %c0_6, %c0_7], %6 {strides = array<i32>} : memref<4x1x64xf32, #tpu.memory_space<vmem>>, vector<1x1x64xf32>,
    %c0_8 = arith.constant 0 : index
    %c1 = arith.constant 1 : index
    %c0_9 = arith.constant 0 : index
    %c0_10 = arith.constant 0 : index
    %7 = vector.load %arg3[%c0_8, %c1, %c0_9, %c0_10] : memref<1x4x1x256xf32, #tpu.memory_space<vmem>>, vector<1x1x1x256xf32>
    %8 = vector.shape_cast %7 : vector<1x1x1x256xf32> to vector<1x256xf32>
    %cst_11 = arith.constant dense<0.000000e+00> : vector<1x64xf32>
    %9 = tpu.matmul %8, %0, %cst_11 {dimension_numbers = #tpu.dot_dimension_numbers<[1], [0], [0], [1], [0, 0, 1, 1], [], []>} : vector<1x256xf32>, vector<256x64xf32>, vector<1x64xf32> -> vector<1x64xf32>
    %c1_12 = arith.constant 1 : index
    %c0_13 = arith.constant 0 : index
    %c0_14 = arith.constant 0 : index
    %10 = vector.load %arg6[%c1_12, %c0_13, %c0_14] : memref<4x1x64xf32, #tpu.memory_space<vmem>>, vector<1x1x64xf32>
    %11 = vector.shape_cast %10 : vector<1x1x64xf32> to vector<1x64xf32>
    %12 = vector.shape_cast %9 : vector<1x64xf32> to vector<1x1x64xf32>
    tpu.vector_store %arg6[%c1_12, %c0_13, %c0_14], %12 {strides = array<i32>} : memref<4x1x64xf32, #tpu.memory_space<vmem>>, vector<1x1x64xf32>,
    %c0_15 = arith.constant 0 : index
    %c2 = arith.constant 2 : index
    %c0_16 = arith.constant 0 : index
    %c0_17 = arith.constant 0 : index
    %13 = vector.load %arg3[%c0_15, %c2, %c0_16, %c0_17] : memref<1x4x1x256xf32, #tpu.memory_space<vmem>>, vector<1x1x1x256xf32>
    %14 = vector.shape_cast %13 : vector<1x1x1x256xf32> to vector<1x256xf32>
    %cst_18 = arith.constant dense<0.000000e+00> : vector<1x64xf32>
    %15 = tpu.matmul %14, %0, %cst_18 {dimension_numbers = #tpu.dot_dimension_numbers<[1], [0], [0], [1], [0, 0, 1, 1], [], []>} : vector<1x256xf32>, vector<256x64xf32>, vector<1x64xf32> -> vector<1x64xf32>
    %c2_19 = arith.constant 2 : index
    %c0_20 = arith.constant 0 : index
    %c0_21 = arith.constant 0 : index
    %16 = vector.load %arg6[%c2_19, %c0_20, %c0_21] : memref<4x1x64xf32, #tpu.memory_space<vmem>>, vector<1x1x64xf32>
    %17 = vector.shape_cast %16 : vector<1x1x64xf32> to vector<1x64xf32>
    %18 = vector.shape_cast %15 : vector<1x64xf32> to vector<1x1x64xf32>
    tpu.vector_store %arg6[%c2_19, %c0_20, %c0_21], %18 {strides = array<i32>} : memref<4x1x64xf32, #tpu.memory_space<vmem>>, vector<1x1x64xf32>,
    %c0_22 = arith.constant 0 : index
    %c3 = arith.constant 3 : index
    %c0_23 = arith.constant 0 : index
    %c0_24 = arith.constant 0 : index
    %19 = vector.load %arg3[%c0_22, %c3, %c0_23, %c0_24] : memref<1x4x1x256xf32, #tpu.memory_space<vmem>>, vector<1x1x1x256xf32>
    %20 = vector.shape_cast %19 : vector<1x1x1x256xf32> to vector<1x256xf32>
    %cst_25 = arith.constant dense<0.000000e+00> : vector<1x64xf32>
    %21 = tpu.matmul %20, %0, %cst_25 {dimension_numbers = #tpu.dot_dimension_numbers<[1], [0], [0], [1], [0, 0, 1, 1], [], []>} : vector<1x256xf32>, vector<256x64xf32>, vector<1x64xf32> -> vector<1x64xf32>
    %c3_26 = arith.constant 3 : index
    %c0_27 = arith.constant 0 : index
    %c0_28 = arith.constant 0 : index
    %22 = vector.load %arg6[%c3_26, %c0_27, %c0_28] : memref<4x1x64xf32, #tpu.memory_space<vmem>>, vector<1x1x64xf32>
    %23 = vector.shape_cast %22 : vector<1x1x64xf32> to vector<1x64xf32>
    %24 = vector.shape_cast %21 : vector<1x64xf32> to vector<1x1x64xf32>
    tpu.vector_store %arg6[%c3_26, %c0_27, %c0_28], %24 {strides = array<i32>} : memref<4x1x64xf32, #tpu.memory_space<vmem>>, vector<1x1x64xf32>,
    %c0_29 = arith.constant 0 : index
    %c0_30 = arith.constant 0 : index
    %25 = memref.load %arg2[%c0_29, %c0_30] : memref<8x4xf32, #tpu.memory_space<smem>>
    %c0_31 = arith.constant 0 : index
    %c0_32 = arith.constant 0 : index
    %c0_33 = arith.constant 0 : index
    %26 = vector.load %arg6[%c0_31, %c0_32, %c0_33] : memref<4x1x64xf32, #tpu.memory_space<vmem>>, vector<1x1x64xf32>
    %27 = vector.shape_cast %26 : vector<1x1x64xf32> to vector<1x64xf32>
    %28 = vector.broadcast %25 : f32 to vector<1x64xf32>
    %29 = arith.mulf %28, %27 : vector<1x64xf32>
    %c0_34 = arith.constant 0 : index
    %c1_35 = arith.constant 1 : index
    %30 = memref.load %arg2[%c0_34, %c1_35] : memref<8x4xf32, #tpu.memory_space<smem>>
    %c1_36 = arith.constant 1 : index
    %c0_37 = arith.constant 0 : index
    %c0_38 = arith.constant 0 : index
    %31 = vector.load %arg6[%c1_36, %c0_37, %c0_38] : memref<4x1x64xf32, #tpu.memory_space<vmem>>, vector<1x1x64xf32>
    %32 = vector.shape_cast %31 : vector<1x1x64xf32> to vector<1x64xf32>
    %33 = vector.broadcast %30 : f32 to vector<1x64xf32>
    %34 = arith.mulf %33, %32 : vector<1x64xf32>
    %35 = arith.addf %29, %34 : vector<1x64xf32>
    %c0_39 = arith.constant 0 : index
    %c2_40 = arith.constant 2 : index
    %36 = memref.load %arg2[%c0_39, %c2_40] : memref<8x4xf32, #tpu.memory_space<smem>>
    %c2_41 = arith.constant 2 : index
    %c0_42 = arith.constant 0 : index
    %c0_43 = arith.constant 0 : index
    %37 = vector.load %arg6[%c2_41, %c0_42, %c0_43] : memref<4x1x64xf32, #tpu.memory_space<vmem>>, vector<1x1x64xf32>
    %38 = vector.shape_cast %37 : vector<1x1x64xf32> to vector<1x64xf32>
    %39 = vector.broadcast %36 : f32 to vector<1x64xf32>
    %40 = arith.mulf %39, %38 : vector<1x64xf32>
    %41 = arith.addf %35, %40 : vector<1x64xf32>
    %c0_44 = arith.constant 0 : index
    %c3_45 = arith.constant 3 : index
    %42 = memref.load %arg2[%c0_44, %c3_45] : memref<8x4xf32, #tpu.memory_space<smem>>
    %c3_46 = arith.constant 3 : index
    %c0_47 = arith.constant 0 : index
    %c0_48 = arith.constant 0 : index
    %43 = vector.load %arg6[%c3_46, %c0_47, %c0_48] : memref<4x1x64xf32, #tpu.memory_space<vmem>>, vector<1x1x64xf32>
    %44 = vector.shape_cast %43 : vector<1x1x64xf32> to vector<1x64xf32>
    %45 = vector.broadcast %42 : f32 to vector<1x64xf32>
    %46 = arith.mulf %45, %44 : vector<1x64xf32>
    %47 = arith.addf %41, %46 : vector<1x64xf32>
    %c0_49 = arith.constant 0 : index
    %c0_50 = arith.constant 0 : index
    %c0_51 = arith.constant 0 : index
    %c0_52 = arith.constant 0 : index
    %48 = vector.load %arg5[%c0_49, %c0_50, %c0_51, %c0_52] : memref<1x8x1x64xf32, #tpu.memory_space<vmem>>, vector<1x1x1x64xf32>
    %49 = vector.shape_cast %48 : vector<1x1x1x64xf32> to vector<1x64xf32>
    %50 = vector.shape_cast %47 : vector<1x64xf32> to vector<1x1x1x64xf32>
    tpu.vector_store %arg5[%c0_49, %c0_50, %c0_51, %c0_52], %50 {strides = array<i32>} : memref<1x8x1x64xf32, #tpu.memory_space<vmem>>, vector<1x1x1x64xf32>,
    %c1_53 = arith.constant 1 : index
    %c0_54 = arith.constant 0 : index
    %51 = memref.load %arg2[%c1_53, %c0_54] : memref<8x4xf32, #tpu.memory_space<smem>>
    %c0_55 = arith.constant 0 : index
    %c0_56 = arith.constant 0 : index
    %c0_57 = arith.constant 0 : index
    %52 = vector.load %arg6[%c0_55, %c0_56, %c0_57] : memref<4x1x64xf32, #tpu.memory_space<vmem>>, vector<1x1x64xf32>
    %53 = vector.shape_cast %52 : vector<1x1x64xf32> to vector<1x64xf32>
    %54 = vector.broadcast %51 : f32 to vector<1x64xf32>
    %55 = arith.mulf %54, %53 : vector<1x64xf32>
    %c1_58 = arith.constant 1 : index
    %c1_59 = arith.constant 1 : index
    %56 = memref.load %arg2[%c1_58, %c1_59] : memref<8x4xf32, #tpu.memory_space<smem>>
    %c1_60 = arith.constant 1 : index
    %c0_61 = arith.constant 0 : index
    %c0_62 = arith.constant 0 : index
    %57 = vector.load %arg6[%c1_60, %c0_61, %c0_62] : memref<4x1x64xf32, #tpu.memory_space<vmem>>, vector<1x1x64xf32>
    %58 = vector.shape_cast %57 : vector<1x1x64xf32> to vector<1x64xf32>
    %59 = vector.broadcast %56 : f32 to vector<1x64xf32>
    %60 = arith.mulf %59, %58 : vector<1x64xf32>
    %61 = arith.addf %55, %60 : vector<1x64xf32>
    %c1_63 = arith.constant 1 : index
    %c2_64 = arith.constant 2 : index
    %62 = memref.load %arg2[%c1_63, %c2_64] : memref<8x4xf32, #tpu.memory_space<smem>>
    %c2_65 = arith.constant 2 : index
    %c0_66 = arith.constant 0 : index
    %c0_67 = arith.constant 0 : index
    %63 = vector.load %arg6[%c2_65, %c0_66, %c0_67] : memref<4x1x64xf32, #tpu.memory_space<vmem>>, vector<1x1x64xf32>
    %64 = vector.shape_cast %63 : vector<1x1x64xf32> to vector<1x64xf32>
    %65 = vector.broadcast %62 : f32 to vector<1x64xf32>
    %66 = arith.mulf %65, %64 : vector<1x64xf32>
    %67 = arith.addf %61, %66 : vector<1x64xf32>
    %c1_68 = arith.constant 1 : index
    %c3_69 = arith.constant 3 : index
    %68 = memref.load %arg2[%c1_68, %c3_69] : memref<8x4xf32, #tpu.memory_space<smem>>
    %c3_70 = arith.constant 3 : index
    %c0_71 = arith.constant 0 : index
    %c0_72 = arith.constant 0 : index
    %69 = vector.load %arg6[%c3_70, %c0_71, %c0_72] : memref<4x1x64xf32, #tpu.memory_space<vmem>>, vector<1x1x64xf32>
    %70 = vector.shape_cast %69 : vector<1x1x64xf32> to vector<1x64xf32>
    %71 = vector.broadcast %68 : f32 to vector<1x64xf32>
    %72 = arith.mulf %71, %70 : vector<1x64xf32>
    %73 = arith.addf %67, %72 : vector<1x64xf32>
    %c0_73 = arith.constant 0 : index
    %c1_74 = arith.constant 1 : index
    %c0_75 = arith.constant 0 : index
    %c0_76 = arith.constant 0 : index
    %74 = vector.load %arg5[%c0_73, %c1_74, %c0_75, %c0_76] : memref<1x8x1x64xf32, #tpu.memory_space<vmem>>, vector<1x1x1x64xf32>
    %75 = vector.shape_cast %74 : vector<1x1x1x64xf32> to vector<1x64xf32>
    %76 = vector.shape_cast %73 : vector<1x64xf32> to vector<1x1x1x64xf32>
    tpu.vector_store %arg5[%c0_73, %c1_74, %c0_75, %c0_76], %76 {strides = array<i32>} : memref<1x8x1x64xf32, #tpu.memory_space<vmem>>, vector<1x1x1x64xf32>,
    %c2_77 = arith.constant 2 : index
    %c0_78 = arith.constant 0 : index
    %77 = memref.load %arg2[%c2_77, %c0_78] : memref<8x4xf32, #tpu.memory_space<smem>>
    %c0_79 = arith.constant 0 : index
    %c0_80 = arith.constant 0 : index
    %c0_81 = arith.constant 0 : index
    %78 = vector.load %arg6[%c0_79, %c0_80, %c0_81] : memref<4x1x64xf32, #tpu.memory_space<vmem>>, vector<1x1x64xf32>
    %79 = vector.shape_cast %78 : vector<1x1x64xf32> to vector<1x64xf32>
    %80 = vector.broadcast %77 : f32 to vector<1x64xf32>
    %81 = arith.mulf %80, %79 : vector<1x64xf32>
    %c2_82 = arith.constant 2 : index
    %c1_83 = arith.constant 1 : index
    %82 = memref.load %arg2[%c2_82, %c1_83] : memref<8x4xf32, #tpu.memory_space<smem>>
    %c1_84 = arith.constant 1 : index
    %c0_85 = arith.constant 0 : index
    %c0_86 = arith.constant 0 : index
    %83 = vector.load %arg6[%c1_84, %c0_85, %c0_86] : memref<4x1x64xf32, #tpu.memory_space<vmem>>, vector<1x1x64xf32>
    %84 = vector.shape_cast %83 : vector<1x1x64xf32> to vector<1x64xf32>
    %85 = vector.broadcast %82 : f32 to vector<1x64xf32>
    %86 = arith.mulf %85, %84 : vector<1x64xf32>
    %87 = arith.addf %81, %86 : vector<1x64xf32>
    %c2_87 = arith.constant 2 : index
    %c2_88 = arith.constant 2 : index
    %88 = memref.load %arg2[%c2_87, %c2_88] : memref<8x4xf32, #tpu.memory_space<smem>>
    %c2_89 = arith.constant 2 : index
    %c0_90 = arith.constant 0 : index
    %c0_91 = arith.constant 0 : index
    %89 = vector.load %arg6[%c2_89, %c0_90, %c0_91] : memref<4x1x64xf32, #tpu.memory_space<vmem>>, vector<1x1x64xf32>
    %90 = vector.shape_cast %89 : vector<1x1x64xf32> to vector<1x64xf32>
    %91 = vector.broadcast %88 : f32 to vector<1x64xf32>
    %92 = arith.mulf %91, %90 : vector<1x64xf32>
    %93 = arith.addf %87, %92 : vector<1x64xf32>
    %c2_92 = arith.constant 2 : index
    %c3_93 = arith.constant 3 : index
    %94 = memref.load %arg2[%c2_92, %c3_93] : memref<8x4xf32, #tpu.memory_space<smem>>
    %c3_94 = arith.constant 3 : index
    %c0_95 = arith.constant 0 : index
    %c0_96 = arith.constant 0 : index
    %95 = vector.load %arg6[%c3_94, %c0_95, %c0_96] : memref<4x1x64xf32, #tpu.memory_space<vmem>>, vector<1x1x64xf32>
    %96 = vector.shape_cast %95 : vector<1x1x64xf32> to vector<1x64xf32>
    %97 = vector.broadcast %94 : f32 to vector<1x64xf32>
    %98 = arith.mulf %97, %96 : vector<1x64xf32>
    %99 = arith.addf %93, %98 : vector<1x64xf32>
    %c0_97 = arith.constant 0 : index
    %c2_98 = arith.constant 2 : index
    %c0_99 = arith.constant 0 : index
    %c0_100 = arith.constant 0 : index
    %100 = vector.load %arg5[%c0_97, %c2_98, %c0_99, %c0_100] : memref<1x8x1x64xf32, #tpu.memory_space<vmem>>, vector<1x1x1x64xf32>
    %101 = vector.shape_cast %100 : vector<1x1x1x64xf32> to vector<1x64xf32>
    %102 = vector.shape_cast %99 : vector<1x64xf32> to vector<1x1x1x64xf32>
    tpu.vector_store %arg5[%c0_97, %c2_98, %c0_99, %c0_100], %102 {strides = array<i32>} : memref<1x8x1x64xf32, #tpu.memory_space<vmem>>, vector<1x1x1x64xf32>,
    %c3_101 = arith.constant 3 : index
    %c0_102 = arith.constant 0 : index
    %103 = memref.load %arg2[%c3_101, %c0_102] : memref<8x4xf32, #tpu.memory_space<smem>>
    %c0_103 = arith.constant 0 : index
    %c0_104 = arith.constant 0 : index
    %c0_105 = arith.constant 0 : index
    %104 = vector.load %arg6[%c0_103, %c0_104, %c0_105] : memref<4x1x64xf32, #tpu.memory_space<vmem>>, vector<1x1x64xf32>
    %105 = vector.shape_cast %104 : vector<1x1x64xf32> to vector<1x64xf32>
    %106 = vector.broadcast %103 : f32 to vector<1x64xf32>
    %107 = arith.mulf %106, %105 : vector<1x64xf32>
    %c3_106 = arith.constant 3 : index
    %c1_107 = arith.constant 1 : index
    %108 = memref.load %arg2[%c3_106, %c1_107] : memref<8x4xf32, #tpu.memory_space<smem>>
    %c1_108 = arith.constant 1 : index
    %c0_109 = arith.constant 0 : index
    %c0_110 = arith.constant 0 : index
    %109 = vector.load %arg6[%c1_108, %c0_109, %c0_110] : memref<4x1x64xf32, #tpu.memory_space<vmem>>, vector<1x1x64xf32>
    %110 = vector.shape_cast %109 : vector<1x1x64xf32> to vector<1x64xf32>
    %111 = vector.broadcast %108 : f32 to vector<1x64xf32>
    %112 = arith.mulf %111, %110 : vector<1x64xf32>
    %113 = arith.addf %107, %112 : vector<1x64xf32>
    %c3_111 = arith.constant 3 : index
    %c2_112 = arith.constant 2 : index
    %114 = memref.load %arg2[%c3_111, %c2_112] : memref<8x4xf32, #tpu.memory_space<smem>>
    %c2_113 = arith.constant 2 : index
    %c0_114 = arith.constant 0 : index
    %c0_115 = arith.constant 0 : index
    %115 = vector.load %arg6[%c2_113, %c0_114, %c0_115] : memref<4x1x64xf32, #tpu.memory_space<vmem>>, vector<1x1x64xf32>
    %116 = vector.shape_cast %115 : vector<1x1x64xf32> to vector<1x64xf32>
    %117 = vector.broadcast %114 : f32 to vector<1x64xf32>
    %118 = arith.mulf %117, %116 : vector<1x64xf32>
    %119 = arith.addf %113, %118 : vector<1x64xf32>
    %c3_116 = arith.constant 3 : index
    %c3_117 = arith.constant 3 : index
    %120 = memref.load %arg2[%c3_116, %c3_117] : memref<8x4xf32, #tpu.memory_space<smem>>
    %c3_118 = arith.constant 3 : index
    %c0_119 = arith.constant 0 : index
    %c0_120 = arith.constant 0 : index
    %121 = vector.load %arg6[%c3_118, %c0_119, %c0_120] : memref<4x1x64xf32, #tpu.memory_space<vmem>>, vector<1x1x64xf32>
    %122 = vector.shape_cast %121 : vector<1x1x64xf32> to vector<1x64xf32>
    %123 = vector.broadcast %120 : f32 to vector<1x64xf32>
    %124 = arith.mulf %123, %122 : vector<1x64xf32>
    %125 = arith.addf %119, %124 : vector<1x64xf32>
    %c0_121 = arith.constant 0 : index
    %c3_122 = arith.constant 3 : index
    %c0_123 = arith.constant 0 : index
    %c0_124 = arith.constant 0 : index
    %126 = vector.load %arg5[%c0_121, %c3_122, %c0_123, %c0_124] : memref<1x8x1x64xf32, #tpu.memory_space<vmem>>, vector<1x1x1x64xf32>
    %127 = vector.shape_cast %126 : vector<1x1x1x64xf32> to vector<1x64xf32>
    %128 = vector.shape_cast %125 : vector<1x64xf32> to vector<1x1x1x64xf32>
    tpu.vector_store %arg5[%c0_121, %c3_122, %c0_123, %c0_124], %128 {strides = array<i32>} : memref<1x8x1x64xf32, #tpu.memory_space<vmem>>, vector<1x1x1x64xf32>,
    %c4 = arith.constant 4 : index
    %c0_125 = arith.constant 0 : index
    %129 = memref.load %arg2[%c4, %c0_125] : memref<8x4xf32, #tpu.memory_space<smem>>
    %c0_126 = arith.constant 0 : index
    %c0_127 = arith.constant 0 : index
    %c0_128 = arith.constant 0 : index
    %130 = vector.load %arg6[%c0_126, %c0_127, %c0_128] : memref<4x1x64xf32, #tpu.memory_space<vmem>>, vector<1x1x64xf32>
    %131 = vector.shape_cast %130 : vector<1x1x64xf32> to vector<1x64xf32>
    %132 = vector.broadcast %129 : f32 to vector<1x64xf32>
    %133 = arith.mulf %132, %131 : vector<1x64xf32>
    %c4_129 = arith.constant 4 : index
    %c1_130 = arith.constant 1 : index
    %134 = memref.load %arg2[%c4_129, %c1_130] : memref<8x4xf32, #tpu.memory_space<smem>>
    %c1_131 = arith.constant 1 : index
    %c0_132 = arith.constant 0 : index
    %c0_133 = arith.constant 0 : index
    %135 = vector.load %arg6[%c1_131, %c0_132, %c0_133] : memref<4x1x64xf32, #tpu.memory_space<vmem>>, vector<1x1x64xf32>
    %136 = vector.shape_cast %135 : vector<1x1x64xf32> to vector<1x64xf32>
    %137 = vector.broadcast %134 : f32 to vector<1x64xf32>
    %138 = arith.mulf %137, %136 : vector<1x64xf32>
    %139 = arith.addf %133, %138 : vector<1x64xf32>
    %c4_134 = arith.constant 4 : index
    %c2_135 = arith.constant 2 : index
    %140 = memref.load %arg2[%c4_134, %c2_135] : memref<8x4xf32, #tpu.memory_space<smem>>
    %c2_136 = arith.constant 2 : index
    %c0_137 = arith.constant 0 : index
    %c0_138 = arith.constant 0 : index
    %141 = vector.load %arg6[%c2_136, %c0_137, %c0_138] : memref<4x1x64xf32, #tpu.memory_space<vmem>>, vector<1x1x64xf32>
    %142 = vector.shape_cast %141 : vector<1x1x64xf32> to vector<1x64xf32>
    %143 = vector.broadcast %140 : f32 to vector<1x64xf32>
    %144 = arith.mulf %143, %142 : vector<1x64xf32>
    %145 = arith.addf %139, %144 : vector<1x64xf32>
    %c4_139 = arith.constant 4 : index
    %c3_140 = arith.constant 3 : index
    %146 = memref.load %arg2[%c4_139, %c3_140] : memref<8x4xf32, #tpu.memory_space<smem>>
    %c3_141 = arith.constant 3 : index
    %c0_142 = arith.constant 0 : index
    %c0_143 = arith.constant 0 : index
    %147 = vector.load %arg6[%c3_141, %c0_142, %c0_143] : memref<4x1x64xf32, #tpu.memory_space<vmem>>, vector<1x1x64xf32>
    %148 = vector.shape_cast %147 : vector<1x1x64xf32> to vector<1x64xf32>
    %149 = vector.broadcast %146 : f32 to vector<1x64xf32>
    %150 = arith.mulf %149, %148 : vector<1x64xf32>
    %151 = arith.addf %145, %150 : vector<1x64xf32>
    %c0_144 = arith.constant 0 : index
    %c4_145 = arith.constant 4 : index
    %c0_146 = arith.constant 0 : index
    %c0_147 = arith.constant 0 : index
    %152 = vector.load %arg5[%c0_144, %c4_145, %c0_146, %c0_147] : memref<1x8x1x64xf32, #tpu.memory_space<vmem>>, vector<1x1x1x64xf32>
    %153 = vector.shape_cast %152 : vector<1x1x1x64xf32> to vector<1x64xf32>
    %154 = vector.shape_cast %151 : vector<1x64xf32> to vector<1x1x1x64xf32>
    tpu.vector_store %arg5[%c0_144, %c4_145, %c0_146, %c0_147], %154 {strides = array<i32>} : memref<1x8x1x64xf32, #tpu.memory_space<vmem>>, vector<1x1x1x64xf32>,
    %c5 = arith.constant 5 : index
    %c0_148 = arith.constant 0 : index
    %155 = memref.load %arg2[%c5, %c0_148] : memref<8x4xf32, #tpu.memory_space<smem>>
    %c0_149 = arith.constant 0 : index
    %c0_150 = arith.constant 0 : index
    %c0_151 = arith.constant 0 : index
    %156 = vector.load %arg6[%c0_149, %c0_150, %c0_151] : memref<4x1x64xf32, #tpu.memory_space<vmem>>, vector<1x1x64xf32>
    %157 = vector.shape_cast %156 : vector<1x1x64xf32> to vector<1x64xf32>
    %158 = vector.broadcast %155 : f32 to vector<1x64xf32>
    %159 = arith.mulf %158, %157 : vector<1x64xf32>
    %c5_152 = arith.constant 5 : index
    %c1_153 = arith.constant 1 : index
    %160 = memref.load %arg2[%c5_152, %c1_153] : memref<8x4xf32, #tpu.memory_space<smem>>
    %c1_154 = arith.constant 1 : index
    %c0_155 = arith.constant 0 : index
    %c0_156 = arith.constant 0 : index
    %161 = vector.load %arg6[%c1_154, %c0_155, %c0_156] : memref<4x1x64xf32, #tpu.memory_space<vmem>>, vector<1x1x64xf32>
    %162 = vector.shape_cast %161 : vector<1x1x64xf32> to vector<1x64xf32>
    %163 = vector.broadcast %160 : f32 to vector<1x64xf32>
    %164 = arith.mulf %163, %162 : vector<1x64xf32>
    %165 = arith.addf %159, %164 : vector<1x64xf32>
    %c5_157 = arith.constant 5 : index
    %c2_158 = arith.constant 2 : index
    %166 = memref.load %arg2[%c5_157, %c2_158] : memref<8x4xf32, #tpu.memory_space<smem>>
    %c2_159 = arith.constant 2 : index
    %c0_160 = arith.constant 0 : index
    %c0_161 = arith.constant 0 : index
    %167 = vector.load %arg6[%c2_159, %c0_160, %c0_161] : memref<4x1x64xf32, #tpu.memory_space<vmem>>, vector<1x1x64xf32>
    %168 = vector.shape_cast %167 : vector<1x1x64xf32> to vector<1x64xf32>
    %169 = vector.broadcast %166 : f32 to vector<1x64xf32>
    %170 = arith.mulf %169, %168 : vector<1x64xf32>
    %171 = arith.addf %165, %170 : vector<1x64xf32>
    %c5_162 = arith.constant 5 : index
    %c3_163 = arith.constant 3 : index
    %172 = memref.load %arg2[%c5_162, %c3_163] : memref<8x4xf32, #tpu.memory_space<smem>>
    %c3_164 = arith.constant 3 : index
    %c0_165 = arith.constant 0 : index
    %c0_166 = arith.constant 0 : index
    %173 = vector.load %arg6[%c3_164, %c0_165, %c0_166] : memref<4x1x64xf32, #tpu.memory_space<vmem>>, vector<1x1x64xf32>
    %174 = vector.shape_cast %173 : vector<1x1x64xf32> to vector<1x64xf32>
    %175 = vector.broadcast %172 : f32 to vector<1x64xf32>
    %176 = arith.mulf %175, %174 : vector<1x64xf32>
    %177 = arith.addf %171, %176 : vector<1x64xf32>
    %c0_167 = arith.constant 0 : index
    %c5_168 = arith.constant 5 : index
    %c0_169 = arith.constant 0 : index
    %c0_170 = arith.constant 0 : index
    %178 = vector.load %arg5[%c0_167, %c5_168, %c0_169, %c0_170] : memref<1x8x1x64xf32, #tpu.memory_space<vmem>>, vector<1x1x1x64xf32>
    %179 = vector.shape_cast %178 : vector<1x1x1x64xf32> to vector<1x64xf32>
    %180 = vector.shape_cast %177 : vector<1x64xf32> to vector<1x1x1x64xf32>
    tpu.vector_store %arg5[%c0_167, %c5_168, %c0_169, %c0_170], %180 {strides = array<i32>} : memref<1x8x1x64xf32, #tpu.memory_space<vmem>>, vector<1x1x1x64xf32>,
    %c6 = arith.constant 6 : index
    %c0_171 = arith.constant 0 : index
    %181 = memref.load %arg2[%c6, %c0_171] : memref<8x4xf32, #tpu.memory_space<smem>>
    %c0_172 = arith.constant 0 : index
    %c0_173 = arith.constant 0 : index
    %c0_174 = arith.constant 0 : index
    %182 = vector.load %arg6[%c0_172, %c0_173, %c0_174] : memref<4x1x64xf32, #tpu.memory_space<vmem>>, vector<1x1x64xf32>
    %183 = vector.shape_cast %182 : vector<1x1x64xf32> to vector<1x64xf32>
    %184 = vector.broadcast %181 : f32 to vector<1x64xf32>
    %185 = arith.mulf %184, %183 : vector<1x64xf32>
    %c6_175 = arith.constant 6 : index
    %c1_176 = arith.constant 1 : index
    %186 = memref.load %arg2[%c6_175, %c1_176] : memref<8x4xf32, #tpu.memory_space<smem>>
    %c1_177 = arith.constant 1 : index
    %c0_178 = arith.constant 0 : index
    %c0_179 = arith.constant 0 : index
    %187 = vector.load %arg6[%c1_177, %c0_178, %c0_179] : memref<4x1x64xf32, #tpu.memory_space<vmem>>, vector<1x1x64xf32>
    %188 = vector.shape_cast %187 : vector<1x1x64xf32> to vector<1x64xf32>
    %189 = vector.broadcast %186 : f32 to vector<1x64xf32>
    %190 = arith.mulf %189, %188 : vector<1x64xf32>
    %191 = arith.addf %185, %190 : vector<1x64xf32>
    %c6_180 = arith.constant 6 : index
    %c2_181 = arith.constant 2 : index
    %192 = memref.load %arg2[%c6_180, %c2_181] : memref<8x4xf32, #tpu.memory_space<smem>>
    %c2_182 = arith.constant 2 : index
    %c0_183 = arith.constant 0 : index
    %c0_184 = arith.constant 0 : index
    %193 = vector.load %arg6[%c2_182, %c0_183, %c0_184] : memref<4x1x64xf32, #tpu.memory_space<vmem>>, vector<1x1x64xf32>
    %194 = vector.shape_cast %193 : vector<1x1x64xf32> to vector<1x64xf32>
    %195 = vector.broadcast %192 : f32 to vector<1x64xf32>
    %196 = arith.mulf %195, %194 : vector<1x64xf32>
    %197 = arith.addf %191, %196 : vector<1x64xf32>
    %c6_185 = arith.constant 6 : index
    %c3_186 = arith.constant 3 : index
    %198 = memref.load %arg2[%c6_185, %c3_186] : memref<8x4xf32, #tpu.memory_space<smem>>
    %c3_187 = arith.constant 3 : index
    %c0_188 = arith.constant 0 : index
    %c0_189 = arith.constant 0 : index
    %199 = vector.load %arg6[%c3_187, %c0_188, %c0_189] : memref<4x1x64xf32, #tpu.memory_space<vmem>>, vector<1x1x64xf32>
    %200 = vector.shape_cast %199 : vector<1x1x64xf32> to vector<1x64xf32>
    %201 = vector.broadcast %198 : f32 to vector<1x64xf32>
    %202 = arith.mulf %201, %200 : vector<1x64xf32>
    %203 = arith.addf %197, %202 : vector<1x64xf32>
    %c0_190 = arith.constant 0 : index
    %c6_191 = arith.constant 6 : index
    %c0_192 = arith.constant 0 : index
    %c0_193 = arith.constant 0 : index
    %204 = vector.load %arg5[%c0_190, %c6_191, %c0_192, %c0_193] : memref<1x8x1x64xf32, #tpu.memory_space<vmem>>, vector<1x1x1x64xf32>
    %205 = vector.shape_cast %204 : vector<1x1x1x64xf32> to vector<1x64xf32>
    %206 = vector.shape_cast %203 : vector<1x64xf32> to vector<1x1x1x64xf32>
    tpu.vector_store %arg5[%c0_190, %c6_191, %c0_192, %c0_193], %206 {strides = array<i32>} : memref<1x8x1x64xf32, #tpu.memory_space<vmem>>, vector<1x1x1x64xf32>,
    %c7 = arith.constant 7 : index
    %c0_194 = arith.constant 0 : index
    %207 = memref.load %arg2[%c7, %c0_194] : memref<8x4xf32, #tpu.memory_space<smem>>
    %c0_195 = arith.constant 0 : index
    %c0_196 = arith.constant 0 : index
    %c0_197 = arith.constant 0 : index
    %208 = vector.load %arg6[%c0_195, %c0_196, %c0_197] : memref<4x1x64xf32, #tpu.memory_space<vmem>>, vector<1x1x64xf32>
    %209 = vector.shape_cast %208 : vector<1x1x64xf32> to vector<1x64xf32>
    %210 = vector.broadcast %207 : f32 to vector<1x64xf32>
    %211 = arith.mulf %210, %209 : vector<1x64xf32>
    %c7_198 = arith.constant 7 : index
    %c1_199 = arith.constant 1 : index
    %212 = memref.load %arg2[%c7_198, %c1_199] : memref<8x4xf32, #tpu.memory_space<smem>>
    %c1_200 = arith.constant 1 : index
    %c0_201 = arith.constant 0 : index
    %c0_202 = arith.constant 0 : index
    %213 = vector.load %arg6[%c1_200, %c0_201, %c0_202] : memref<4x1x64xf32, #tpu.memory_space<vmem>>, vector<1x1x64xf32>
    %214 = vector.shape_cast %213 : vector<1x1x64xf32> to vector<1x64xf32>
    %215 = vector.broadcast %212 : f32 to vector<1x64xf32>
    %216 = arith.mulf %215, %214 : vector<1x64xf32>
    %217 = arith.addf %211, %216 : vector<1x64xf32>
    %c7_203 = arith.constant 7 : index
    %c2_204 = arith.constant 2 : index
    %218 = memref.load %arg2[%c7_203, %c2_204] : memref<8x4xf32, #tpu.memory_space<smem>>
    %c2_205 = arith.constant 2 : index
    %c0_206 = arith.constant 0 : index
    %c0_207 = arith.constant 0 : index
    %219 = vector.load %arg6[%c2_205, %c0_206, %c0_207] : memref<4x1x64xf32, #tpu.memory_space<vmem>>, vector<1x1x64xf32>
    %220 = vector.shape_cast %219 : vector<1x1x64xf32> to vector<1x64xf32>
    %221 = vector.broadcast %218 : f32 to vector<1x64xf32>
    %222 = arith.mulf %221, %220 : vector<1x64xf32>
    %223 = arith.addf %217, %222 : vector<1x64xf32>
    %c7_208 = arith.constant 7 : index
    %c3_209 = arith.constant 3 : index
    %224 = memref.load %arg2[%c7_208, %c3_209] : memref<8x4xf32, #tpu.memory_space<smem>>
    %c3_210 = arith.constant 3 : index
    %c0_211 = arith.constant 0 : index
    %c0_212 = arith.constant 0 : index
    %225 = vector.load %arg6[%c3_210, %c0_211, %c0_212] : memref<4x1x64xf32, #tpu.memory_space<vmem>>, vector<1x1x64xf32>
    %226 = vector.shape_cast %225 : vector<1x1x64xf32> to vector<1x64xf32>
    %227 = vector.broadcast %224 : f32 to vector<1x64xf32>
    %228 = arith.mulf %227, %226 : vector<1x64xf32>
    %229 = arith.addf %223, %228 : vector<1x64xf32>
    %c0_213 = arith.constant 0 : index
    %c7_214 = arith.constant 7 : index
    %c0_215 = arith.constant 0 : index
    %c0_216 = arith.constant 0 : index
    %230 = vector.load %arg5[%c0_213, %c7_214, %c0_215, %c0_216] : memref<1x8x1x64xf32, #tpu.memory_space<vmem>>, vector<1x1x1x64xf32>
    %231 = vector.shape_cast %230 : vector<1x1x1x64xf32> to vector<1x64xf32>
    %232 = vector.shape_cast %229 : vector<1x64xf32> to vector<1x1x1x64xf32>
    tpu.vector_store %arg5[%c0_213, %c7_214, %c0_215, %c0_216], %232 {strides = array<i32>} : memref<1x8x1x64xf32, #tpu.memory_space<vmem>>, vector<1x1x1x64xf32>,
    return
  }
  func.func @transform_0(%arg0: i32, %arg1: i32) -> (i32, i32) {
    %c0_i32 = arith.constant 0 : i32
    %c0_i32_0 = arith.constant 0 : i32
    %c0_i32_1 = arith.constant 0 : i32
    return %c0_i32, %c0_i32_0 : i32, i32
  }
  func.func @transform_1(%arg0: i32, %arg1: i32) -> (i32, i32, i32, i32) {
    %c0_i32 = arith.constant 0 : i32
    %c0_i32_0 = arith.constant 0 : i32
    %c0_i32_1 = arith.constant 0 : i32
    return %arg0, %c0_i32, %arg1, %c0_i32_0 : i32, i32, i32, i32
  }
  func.func @transform_2(%arg0: i32, %arg1: i32) -> (i32, i32) {
    %c0_i32 = arith.constant 0 : i32
    %c0_i32_0 = arith.constant 0 : i32
    %c0_i32_1 = arith.constant 0 : i32
    return %c0_i32, %c0_i32_0 : i32, i32
  }
  func.func @transform_3(%arg0: i32, %arg1: i32) -> (i32, i32, i32, i32) {
    %c0_i32 = arith.constant 0 : i32
    %c0_i32_0 = arith.constant 0 : i32
    %c0_i32_1 = arith.constant 0 : i32
    return %arg0, %c0_i32, %arg1, %c0_i32_0 : i32, i32, i32, i32
  }
}

</mosaic_0001>

<llo_original>
// kernel: tpu_custom_call.1
$region0: #{tpu_custom_call.1}
  #allocation0 [shape = 'u32[]', space=smem, size = 0x4, offset = 0x4, fixed_abs, tag = 'smem constant byte address 0x4 - core index']
  #allocation1 [shape = 'u32[144,128]{1,0:T(1,128)}', space=vmem, size = 0x12000, scoped, tag = 'internal scratch']
  #allocation2 [shape = 'f32[4,1,64]{2,1,0:T(1,128)}', space=vmem, size = 0x800, scoped, tag = 'scratch operand']
  %s0 = inlined_call_operand.vmem [shape: f32[8,4], index: 0, kind: input, shape index: {}]
  %s1 = inlined_call_operand.vmem [shape: f32[2,4,1,256], index: 1, kind: input, shape index: {}]
  %s2 = inlined_call_operand.vmem [shape: f32[256,64], index: 2, kind: input, shape index: {}]
  %s3 = inlined_call_operand.hbm [shape: f32[2,8,1,64], index: 3, kind: output, shape index: {}]
  %s4 = sld [smem:[#allocation0]]
  $region49: #{tpu_custom_call.1} parent=0
    _
  %s6 = ssub.s32 1, %s4
  %s7 = scalar_select 0, %s6, %s4
  $region1: #{tpu_custom_call.1} parent=0
    #allocation3 [shape = 'u8[4096]{0}', space=smem, size = 0x1000, scoped, tag = 'input window, operand 0, single buffered']
    #allocation4 [shape = 's32[2]{0}', space=sflag, size = 0x8, scoped, tag = 'scoped memory for tpu_custom_call.1']
    #allocation5 [shape = 's32[2]{0}', space=sflag, size = 0x8, scoped, tag = 'scoped memory for tpu_custom_call.1']
    #allocation6 [shape = 'u8[8192]{0}', space=vmem, size = 0x2000, scoped, tag = 'output window, operand 0']
    %8 = vsyncpa [#allocation5], 0
    %9 = vsyncpa [#allocation4], 0
    %s10 = scalar_lea.sflag [#allocation4], 1
    %11 = vsyncpa %s10, 0
    loop: start=0, step=1, limit=4
    $region2: #{tpu_custom_call.1} parent=1 // loop_pre_header
      _
    $region3: #{tpu_custom_call.1} parent=1 // loop_header
      %s13 = sphi 0, %s17
      %p14 = scmp.ge.s32.totalorder %s13, 4
      %s20 = sphi 0, %s32
      %s21 = sphi 0, %s28
      %s22 = sphi 0, %s20
      %s23 = sphi 0, %s21
      %s24 = sphi 0, %s22
      %s25 = sphi 0, %s23
      %s33 = sphi 0, %s33
      %s35 = sphi 0, %s33
      %s36 = sphi 0, %s35
      %s50 = sphi 0, %s36
      %s58 = sphi 0, %s60
      %s61 = sphi 0, %s58
      %s62 = sphi 0, %s61
      %s78 = sphi 0, %s62
      %s82 = sphi 0, %s82
      %s84 = sphi 0, %s82
      %s85 = sphi 0, %s84
      %s99 = sphi 0, %s85
      %s107 = sphi 0, %s109
      %s110 = sphi 0, %s107
      %s111 = sphi 0, %s110
      %s127 = sphi 0, %s111
    $region4: #{tpu_custom_call.1} parent=1 // loop_header_branch
      %16 = sbr.rel (%p14) target = $region8
    $region5: #{tpu_custom_call.1} parent=1 // loop_body
      %s18 = ssub.s32 %s13, 1
      %s19 = ssub.s32 %s13, 2
      %s26 = sadd.s32 1, %s21
      %p27 = scmp.ge.s32.totalorder %s26, 1
      %s28 = scalar_select %p27, 0, %s26
      %s29 = sadd.s32 1, %s20
      %s30 = scalar_select %p27, %s29, %s20
      %p31 = scmp.ge.s32.totalorder %s30, 2
      %s32 = scalar_select %p31, 0, %s30
      %s34 = sadd.s32 %s33, 1
      %p37 = scmp.eq.s32.totalorder %s13, 1
      %p38 = scmp.ne.s32.totalorder %s33, %s35
      %p39 = scmp.eq.s32.totalorder %s13, 0
      %p40 = por %p38, %p39
      %p41 = scmp.ne.s32.totalorder %s33, %s35
      %p42 = scmp.eq.s32.totalorder %s18, 1
      %p43 = por %p41, %p42
      %p44 = scmp.ne.s32.totalorder %s35, %s36
      %p45 = scmp.eq.s32.totalorder %s18, 0
      %p46 = por %p44, %p45
      %p47 = scmp.ne.s32.totalorder %s35, %s36
      %p48 = scmp.eq.s32.totalorder %s19, 1
      %p49 = por %p47, %p48
      %p51 = scmp.ne.s32.totalorder %s36, %s50
      %p52 = scmp.eq.s32.totalorder %s19, 0
      %p53 = por %p51, %p52
      %s54 = ssub.s32 %s20, %s32
      %s55 = ssub.s32 %s21, %s28
      %s56 = sor.u32 %s54, %s55
      %p57 = scmp.eq.s32.totalorder %s56, 0
      %s59 = sadd.s32 %s58, 1
      %s60 = scalar_select %p57, %s58, %s59
      %p63 = pneg %p57
      %p64 = scmp.eq.s32.totalorder %s13, 1
      %p65 = por %p63, %p64
      %p66 = scmp.ne.s32.totalorder %s58, %s61
      %p67 = scmp.eq.s32.totalorder %s13, 0
      %p68 = por %p66, %p67
      %p69 = scmp.ne.s32.totalorder %s58, %s61
      %p70 = scmp.eq.s32.totalorder %s18, 1
      %p71 = por %p69, %p70
      %p72 = scmp.ne.s32.totalorder %s61, %s62
      %p73 = scmp.eq.s32.totalorder %s18, 0
      %p74 = por %p72, %p73
      %p75 = scmp.ne.s32.totalorder %s61, %s62
      %p76 = scmp.eq.s32.totalorder %s19, 1
      %p77 = por %p75, %p76
      %p79 = scmp.ne.s32.totalorder %s62, %s78
      %p80 = scmp.eq.s32.totalorder %s19, 0
      %p81 = por %p79, %p80
      %s83 = sadd.s32 %s82, 1
      %p86 = scmp.eq.s32.totalorder %s13, 1
      %p87 = scmp.ne.s32.totalorder %s82, %s84
      %p88 = scmp.eq.s32.totalorder %s13, 0
      %p89 = por %p87, %p88
      %p90 = scmp.ne.s32.totalorder %s82, %s84
      %p91 = scmp.eq.s32.totalorder %s18, 1
      %p92 = por %p90, %p91
      %p93 = scmp.ne.s32.totalorder %s84, %s85
      %p94 = scmp.eq.s32.totalorder %s18, 0
      %p95 = por %p93, %p94
      %p96 = scmp.ne.s32.totalorder %s84, %s85
      %p97 = scmp.eq.s32.totalorder %s19, 1
      %p98 = por %p96, %p97
      %p100 = scmp.ne.s32.totalorder %s85, %s99
      %p101 = scmp.eq.s32.totalorder %s19, 0
      %p102 = por %p100, %p101
      %s103 = ssub.s32 %s20, %s32
      %s104 = ssub.s32 %s21, %s28
      %s105 = sor.u32 %s103, %s104
      %p106 = scmp.eq.s32.totalorder %s105, 0
      %s108 = sadd.s32 %s107, 1
      %s109 = scalar_select %p106, %s107, %s108
      %p112 = pneg %p106
      %p113 = scmp.eq.s32.totalorder %s13, 1
      %p114 = por %p112, %p113
      %p115 = scmp.ne.s32.totalorder %s107, %s110
      %p116 = scmp.eq.s32.totalorder %s13, 0
      %p117 = por %p115, %p116
      %p118 = scmp.ne.s32.totalorder %s107, %s110
      %p119 = scmp.eq.s32.totalorder %s18, 1
      %p120 = por %p118, %p119
      %p121 = scmp.ne.s32.totalorder %s110, %s111
      %p122 = scmp.eq.s32.totalorder %s18, 0
      %p123 = por %p121, %p122
      %p124 = scmp.ne.s32.totalorder %s110, %s111
      %p125 = scmp.eq.s32.totalorder %s19, 1
      %p126 = por %p124, %p125
      %p128 = scmp.ne.s32.totalorder %s111, %s127
      %p129 = scmp.eq.s32.totalorder %s19, 0
      %p130 = por %p128, %p129
      %p131 = scmp.le.s32.totalorder 1, %s13
      %p132 = scmp.lt.s32.totalorder %s13, 3
      %p133 = pnand %p131, %p132
      %p134 = pneg %p133
      // Predicated region
      $region9: #{tpu_custom_call.1} parent=5 // pred_check
        _
      $region10: #{tpu_custom_call.1} parent=5 // pred_check_branch
        %136 = sbr.rel (%p133) target = $region12
      $region11: #{tpu_custom_call.1} parent=5 // pred_region
        %s137 = ssub.s32 %s13, 1
        // Predicated region
        $region13: #{tpu_custom_call.1} parent=11 // pred_check
          %p138 = pneg %p46
        $region14: #{tpu_custom_call.1} parent=11 // pred_check_branch
          %140 = sbr.rel (%p138) target = $region16
        $region15: #{tpu_custom_call.1} parent=11 // pred_region
          %s142 = ssub.s32 128, 128
          %143 = vsyncadd [#allocation5], %s142
          %s145 = sshll.u32 %s0, 4
          %s146 = int_to_ptr.vmem [resolvable:$true] %s145
          %148 = dma.vmem_to_smem %s146, 128, [#allocation3], [#allocation5]
        $region16: #{tpu_custom_call.1} parent=11 // pred_fallthru
          _
        // Predicated region
        $region17: #{tpu_custom_call.1} parent=11 // pred_check
          %p149 = pneg %p95
        $region18: #{tpu_custom_call.1} parent=11 // pred_check_branch
          %151 = sbr.rel (%p149) target = $region20
        $region19: #{tpu_custom_call.1} parent=11 // pred_region
          _
        $region20: #{tpu_custom_call.1} parent=11 // pred_fallthru
          _
      $region12: #{tpu_custom_call.1} parent=5 // pred_fallthru
        _
      %p152 = scmp.lt.s32.totalorder %s13, 2
      // Predicated region
      $region21: #{tpu_custom_call.1} parent=5 // pred_check
        %p153 = pneg %p152
      $region22: #{tpu_custom_call.1} parent=5 // pred_check_branch
        %155 = sbr.rel (%p153) target = $region24
      $region23: #{tpu_custom_call.1} parent=5 // pred_region
        // Predicated region
        $region25: #{tpu_custom_call.1} parent=23 // pred_check
          %p156 = pneg %p68
        $region26: #{tpu_custom_call.1} parent=23 // pred_check_branch
          %158 = sbr.rel (%p156) target = $region28
        $region27: #{tpu_custom_call.1} parent=23 // pred_region
          %p159 = scmp.lt.s32.totalorder %s20, 1
          %s160 = scalar_select %p159, %s20, 1
          %p161 = scmp.lt.s32.totalorder %s21, 0
          %s162 = scalar_select %p161, %s21, 0
          %s163 = smul.addr %s162, 2
          %s164 = smul.addr %s160, 8
          %s165 = sadd.s32 %s163, %s164
          %s166 = scalar_lea.vmem %s1, %s165
        $region28: #{tpu_custom_call.1} parent=23 // pred_fallthru
          _
      $region24: #{tpu_custom_call.1} parent=5 // pred_fallthru
        _
      %p167 = scmp.le.s32.totalorder 1, %s13
      %p168 = scmp.lt.s32.totalorder %s13, 3
      %p169 = pnand %p167, %p168
      %p170 = pneg %p169
      // Predicated region
      $region29: #{tpu_custom_call.1} parent=5 // pred_check
        _
      $region30: #{tpu_custom_call.1} parent=5 // pred_check_branch
        %172 = sbr.rel (%p169) target = $region32
      $region31: #{tpu_custom_call.1} parent=5 // pred_region
        %s173 = ssub.s32 %s13, 1
        // Predicated region
        $region33: #{tpu_custom_call.1} parent=31 // pred_check
          %p174 = pneg %p46
        $region34: #{tpu_custom_call.1} parent=31 // pred_check_branch
          %176 = sbr.rel (%p174) target = $region36
        $region35: #{tpu_custom_call.1} parent=31 // pred_region
          %177 = dma.done [#allocation5], 128
        $region36: #{tpu_custom_call.1} parent=31 // pred_fallthru
          _
        %178 = sfence
        %p179 = pneg %p46
        %p180 = pneg %p43
        %p181 = scmp.lt.s32.totalorder %s22, 1
        %s182 = scalar_select %p181, %s22, 1
        %p183 = scmp.lt.s32.totalorder %s23, 0
        %s184 = scalar_select %p183, %s23, 0
        %s185 = smul.addr %s184, 2
        %s186 = smul.addr %s182, 8
        %s187 = sadd.s32 %s185, %s186
        %s188 = scalar_lea.vmem %s1, %s187
        %p189 = pneg %p74
        %p190 = pneg %p71
        %p191 = pneg %p95
        %p192 = pneg %p92
        %p193 = pneg %p123
        %p194 = pneg %p120
        %s195 = sand.u32 %s110, 1
        %s196 = scalar_lea.sflag [#allocation4], %s195
        %s197 = sand.u32 %s110, 1
        %s198 = smul.addr %s197, 8
        %s199 = scalar_lea.vmem [#allocation6], %s198
        %p200 = scmp.lt.s32.totalorder %s22, 1
        %s201 = scalar_select %p200, %s22, 1
        %p202 = scmp.lt.s32.totalorder %s23, 0
        %s203 = scalar_select %p202, %s23, 0
        %s204 = smul.addr %s203, 2
        %s205 = smul.addr %s201, 8
        %s206 = sadd.s32 %s204, %s205
        %s207 = scalar_lea.vmem %s1, %s206
        %v208 = vld [vmem:[%s2] sm:$0xff]
        %v209 = vld [vmem:[%s2 + $0x8] sm:$0xff]
        %v210 = vld [vmem:[%s2 + $0x10] sm:$0xff]
        %v211 = vld [vmem:[%s2 + $0x18] sm:$0xff]
        %v212 = vld [vmem:[%s2 + $0x20] sm:$0xff]
        %v213 = vld [vmem:[%s2 + $0x28] sm:$0xff]
        %v214 = vld [vmem:[%s2 + $0x30] sm:$0xff]
        %v215 = vld [vmem:[%s2 + $0x38] sm:$0xff]
        %v216 = vld [vmem:[%s2 + $0x40] sm:$0xff]
        %v217 = vld [vmem:[%s2 + $0x48] sm:$0xff]
        %v218 = vld [vmem:[%s2 + $0x50] sm:$0xff]
        %v219 = vld [vmem:[%s2 + $0x58] sm:$0xff]
        %v220 = vld [vmem:[%s2 + $0x60] sm:$0xff]
        %v221 = vld [vmem:[%s2 + $0x68] sm:$0xff]
        %v222 = vld [vmem:[%s2 + $0x70] sm:$0xff]
        %v223 = vld [vmem:[%s2 + $0x78] sm:$0xff]
        %v224 = vld [vmem:[%s2 + $0x80] sm:$0xff]
        %v225 = vld [vmem:[%s2 + $0x88] sm:$0xff]
        %v226 = vld [vmem:[%s2 + $0x90] sm:$0xff]
        %v227 = vld [vmem:[%s2 + $0x98] sm:$0xff]
        %v228 = vld [vmem:[%s2 + $0xa0] sm:$0xff]
        %v229 = vld [vmem:[%s2 + $0xa8] sm:$0xff]
        %v230 = vld [vmem:[%s2 + $0xb0] sm:$0xff]
        %v231 = vld [vmem:[%s2 + $0xb8] sm:$0xff]
        %v232 = vld [vmem:[%s2 + $0xc0] sm:$0xff]
        %v233 = vld [vmem:[%s2 + $0xc8] sm:$0xff]
        %v234 = vld [vmem:[%s2 + $0xd0] sm:$0xff]
        %v235 = vld [vmem:[%s2 + $0xd8] sm:$0xff]
        %v236 = vld [vmem:[%s2 + $0xe0] sm:$0xff]
        %v237 = vld [vmem:[%s2 + $0xe8] sm:$0xff]
        %v238 = vld [vmem:[%s2 + $0xf0] sm:$0xff]
        %v239 = vld [vmem:[%s2 + $0xf8] sm:$0xff]
        %v240 = vld [vmem:[%s207] sm:$0x3]
        %v242 = vlaneseq
        %v243 = vshrl.u32 %v242, 7
        %v244 = vsub.s32 0, %v243
        %v245 = vrot.slane %v240, %v244
        %v246 = vlaneseq
        %v247 = vshrl.u32 %v246, 7
        %v248 = vsub.s32 1, %v247
        %v249 = vrot.slane %v240, %v248
        %252 = vmatprep.subr.mxu0 0.0
        %253 = vmatpush1.msra.mxu0 %v208
        %254 = vmatprep.subr.mxu0 0.0
        %255 = vmatpush1.msra.mxu0 %v209
        %256 = vmatprep.subr.mxu0 0.0
        %257 = vmatpush1.msra.mxu0 %v210
        %258 = vmatprep.subr.mxu0 0.0
        %259 = vmatpush1.msra.mxu0 %v211
        %260 = vmatprep.subr.mxu0 0.0
        %261 = vmatpush1.msra.mxu0 %v212
        %262 = vmatprep.subr.mxu0 0.0
        %263 = vmatpush1.msra.mxu0 %v213
        %264 = vmatprep.subr.mxu0 0.0
        %265 = vmatpush1.msra.mxu0 %v214
        %266 = vmatprep.subr.mxu0 0.0
        %267 = vmatpush1.msra.mxu0 %v215
        %268 = vmatprep.subr.mxu0 0.0
        %269 = vmatpush1.msra.mxu0 %v216
        %270 = vmatprep.subr.mxu0 0.0
        %271 = vmatpush1.msra.mxu0 %v217
        %272 = vmatprep.subr.mxu0 0.0
        %273 = vmatpush1.msra.mxu0 %v218
        %274 = vmatprep.subr.mxu0 0.0
        %275 = vmatpush1.msra.mxu0 %v219
        %276 = vmatprep.subr.mxu0 0.0
        %277 = vmatpush1.msra.mxu0 %v220
        %278 = vmatprep.subr.mxu0 0.0
        %279 = vmatpush1.msra.mxu0 %v221
        %280 = vmatprep.subr.mxu0 0.0
        %281 = vmatpush1.msra.mxu0 %v222
        %282 = vmatprep.subr.mxu0 0.0
        %283 = vmatpush1.msra.mxu0 %v223
        %284 = vmatprep.subr.mxu0 0.0
        %285 = vmatpush1.msra.mxu0 %v224
        %286 = vmatprep.subr.mxu0 0.0
        %287 = vmatpush1.msra.mxu0 %v225
        %288 = vmatprep.subr.mxu0 0.0
        %289 = vmatpush1.msra.mxu0 %v226
        %290 = vmatprep.subr.mxu0 0.0
        %291 = vmatpush1.msra.mxu0 %v227
        %292 = vmatprep.subr.mxu0 0.0
        %293 = vmatpush1.msra.mxu0 %v228
        %294 = vmatprep.subr.mxu0 0.0
        %295 = vmatpush1.msra.mxu0 %v229
        %296 = vmatprep.subr.mxu0 0.0
        %297 = vmatpush1.msra.mxu0 %v230
        %298 = vmatprep.subr.mxu0 0.0
        %299 = vmatpush1.msra.mxu0 %v231
        %300 = vmatprep.subr.mxu0 0.0
        %301 = vmatpush1.msra.mxu0 %v232
        %302 = vmatprep.subr.mxu0 0.0
        %303 = vmatpush1.msra.mxu0 %v233
        %304 = vmatprep.subr.mxu0 0.0
        %305 = vmatpush1.msra.mxu0 %v234
        %306 = vmatprep.subr.mxu0 0.0
        %307 = vmatpush1.msra.mxu0 %v235
        %308 = vmatprep.subr.mxu0 0.0
        %309 = vmatpush1.msra.mxu0 %v236
        %310 = vmatprep.subr.mxu0 0.0
        %311 = vmatpush1.msra.mxu0 %v237
        %312 = vmatprep.subr.mxu0 0.0
        %313 = vmatpush1.msra.mxu0 %v238
        %314 = vmatprep.subr.mxu0 0.0
        %315 = vmatpush1.msra.mxu0 %v239
        %316 = vmatprep.mubr.f32.mxu0 %v249
        %317 = vmatmul.mubr.f32.gmra.mrb[0].mxu0 %v245
        %v318 = vpop.f32.mrb[0].mxu0
        %v319 = vadd.f32 0.0, %v318
        %v320 = vpop.f32.mrb[0].mxu0
        %321 = vdwg.mxu0
        %vm322 = vcmask 516096
        %323 = vst.msk [vmem:[#allocation2] sm:$0x1] %vm322, %v319
        %s324 = scalar_lea.vmem %s207, 2
        %v325 = vld [vmem:[%s324] sm:$0x3]
        %v327 = vlaneseq
        %v328 = vshrl.u32 %v327, 7
        %v329 = vsub.s32 0, %v328
        %v330 = vrot.slane %v325, %v329
        %v331 = vlaneseq
        %v332 = vshrl.u32 %v331, 7
        %v333 = vsub.s32 1, %v332
        %v334 = vrot.slane %v325, %v333
        %337 = vmatprep.subr.mxu0 0.0
        %338 = vmatpush1.msra.mxu0 %v208
        %339 = vmatprep.subr.mxu0 0.0
        %340 = vmatpush1.msra.mxu0 %v209
        %341 = vmatprep.subr.mxu0 0.0
        %342 = vmatpush1.msra.mxu0 %v210
        %343 = vmatprep.subr.mxu0 0.0
        %344 = vmatpush1.msra.mxu0 %v211
        %345 = vmatprep.subr.mxu0 0.0
        %346 = vmatpush1.msra.mxu0 %v212
        %347 = vmatprep.subr.mxu0 0.0
        %348 = vmatpush1.msra.mxu0 %v213
        %349 = vmatprep.subr.mxu0 0.0
        %350 = vmatpush1.msra.mxu0 %v214
        %351 = vmatprep.subr.mxu0 0.0
        %352 = vmatpush1.msra.mxu0 %v215
        %353 = vmatprep.subr.mxu0 0.0
        %354 = vmatpush1.msra.mxu0 %v216
        %355 = vmatprep.subr.mxu0 0.0
        %356 = vmatpush1.msra.mxu0 %v217
        %357 = vmatprep.subr.mxu0 0.0
        %358 = vmatpush1.msra.mxu0 %v218
        %359 = vmatprep.subr.mxu0 0.0
        %360 = vmatpush1.msra.mxu0 %v219
        %361 = vmatprep.subr.mxu0 0.0
        %362 = vmatpush1.msra.mxu0 %v220
        %363 = vmatprep.subr.mxu0 0.0
        %364 = vmatpush1.msra.mxu0 %v221
        %365 = vmatprep.subr.mxu0 0.0
        %366 = vmatpush1.msra.mxu0 %v222
        %367 = vmatprep.subr.mxu0 0.0
        %368 = vmatpush1.msra.mxu0 %v223
        %369 = vmatprep.subr.mxu0 0.0
        %370 = vmatpush1.msra.mxu0 %v224
        %371 = vmatprep.subr.mxu0 0.0
        %372 = vmatpush1.msra.mxu0 %v225
        %373 = vmatprep.subr.mxu0 0.0
        %374 = vmatpush1.msra.mxu0 %v226
        %375 = vmatprep.subr.mxu0 0.0
        %376 = vmatpush1.msra.mxu0 %v227
        %377 = vmatprep.subr.mxu0 0.0
        %378 = vmatpush1.msra.mxu0 %v228
        %379 = vmatprep.subr.mxu0 0.0
        %380 = vmatpush1.msra.mxu0 %v229
        %381 = vmatprep.subr.mxu0 0.0
        %382 = vmatpush1.msra.mxu0 %v230
        %383 = vmatprep.subr.mxu0 0.0
        %384 = vmatpush1.msra.mxu0 %v231
        %385 = vmatprep.subr.mxu0 0.0
        %386 = vmatpush1.msra.mxu0 %v232
        %387 = vmatprep.subr.mxu0 0.0
        %388 = vmatpush1.msra.mxu0 %v233
        %389 = vmatprep.subr.mxu0 0.0
        %390 = vmatpush1.msra.mxu0 %v234
        %391 = vmatprep.subr.mxu0 0.0
        %392 = vmatpush1.msra.mxu0 %v235
        %393 = vmatprep.subr.mxu0 0.0
        %394 = vmatpush1.msra.mxu0 %v236
        %395 = vmatprep.subr.mxu0 0.0
        %396 = vmatpush1.msra.mxu0 %v237
        %397 = vmatprep.subr.mxu0 0.0
        %398 = vmatpush1.msra.mxu0 %v238
        %399 = vmatprep.subr.mxu0 0.0
        %400 = vmatpush1.msra.mxu0 %v239
        %401 = vmatprep.mubr.f32.mxu0 %v334
        %402 = vmatmul.mubr.f32.gmra.mrb[0].mxu0 %v330
        %v403 = vpop.f32.mrb[0].mxu0
        %v404 = vadd.f32 0.0, %v403
        %v405 = vpop.f32.mrb[0].mxu0
        %406 = vdwg.mxu0
        %s407 = scalar_lea.vmem [#allocation2], 1
        %408 = vst.msk [vmem:[%s407] sm:$0x1] %vm322, %v404
        %s409 = scalar_lea.vmem %s207, 4
        %v410 = vld [vmem:[%s409] sm:$0x3]
        %v412 = vlaneseq
        %v413 = vshrl.u32 %v412, 7
        %v414 = vsub.s32 0, %v413
        %v415 = vrot.slane %v410, %v414
        %v416 = vlaneseq
        %v417 = vshrl.u32 %v416, 7
        %v418 = vsub.s32 1, %v417
        %v419 = vrot.slane %v410, %v418
        %422 = vmatprep.subr.mxu0 0.0
        %423 = vmatpush1.msra.mxu0 %v208
        %424 = vmatprep.subr.mxu0 0.0
        %425 = vmatpush1.msra.mxu0 %v209
        %426 = vmatprep.subr.mxu0 0.0
        %427 = vmatpush1.msra.mxu0 %v210
        %428 = vmatprep.subr.mxu0 0.0
        %429 = vmatpush1.msra.mxu0 %v211
        %430 = vmatprep.subr.mxu0 0.0
        %431 = vmatpush1.msra.mxu0 %v212
        %432 = vmatprep.subr.mxu0 0.0
        %433 = vmatpush1.msra.mxu0 %v213
        %434 = vmatprep.subr.mxu0 0.0
        %435 = vmatpush1.msra.mxu0 %v214
        %436 = vmatprep.subr.mxu0 0.0
        %437 = vmatpush1.msra.mxu0 %v215
        %438 = vmatprep.subr.mxu0 0.0
        %439 = vmatpush1.msra.mxu0 %v216
        %440 = vmatprep.subr.mxu0 0.0
        %441 = vmatpush1.msra.mxu0 %v217
        %442 = vmatprep.subr.mxu0 0.0
        %443 = vmatpush1.msra.mxu0 %v218
        %444 = vmatprep.subr.mxu0 0.0
        %445 = vmatpush1.msra.mxu0 %v219
        %446 = vmatprep.subr.mxu0 0.0
        %447 = vmatpush1.msra.mxu0 %v220
        %448 = vmatprep.subr.mxu0 0.0
        %449 = vmatpush1.msra.mxu0 %v221
        %450 = vmatprep.subr.mxu0 0.0
        %451 = vmatpush1.msra.mxu0 %v222
        %452 = vmatprep.subr.mxu0 0.0
        %453 = vmatpush1.msra.mxu0 %v223
        %454 = vmatprep.subr.mxu0 0.0
        %455 = vmatpush1.msra.mxu0 %v224
        %456 = vmatprep.subr.mxu0 0.0
        %457 = vmatpush1.msra.mxu0 %v225
        %458 = vmatprep.subr.mxu0 0.0
        %459 = vmatpush1.msra.mxu0 %v226
        %460 = vmatprep.subr.mxu0 0.0
        %461 = vmatpush1.msra.mxu0 %v227
        %462 = vmatprep.subr.mxu0 0.0
        %463 = vmatpush1.msra.mxu0 %v228
        %464 = vmatprep.subr.mxu0 0.0
        %465 = vmatpush1.msra.mxu0 %v229
        %466 = vmatprep.subr.mxu0 0.0
        %467 = vmatpush1.msra.mxu0 %v230
        %468 = vmatprep.subr.mxu0 0.0
        %469 = vmatpush1.msra.mxu0 %v231
        %470 = vmatprep.subr.mxu0 0.0
        %471 = vmatpush1.msra.mxu0 %v232
        %472 = vmatprep.subr.mxu0 0.0
        %473 = vmatpush1.msra.mxu0 %v233
        %474 = vmatprep.subr.mxu0 0.0
        %475 = vmatpush1.msra.mxu0 %v234
        %476 = vmatprep.subr.mxu0 0.0
        %477 = vmatpush1.msra.mxu0 %v235
        %478 = vmatprep.subr.mxu0 0.0
        %479 = vmatpush1.msra.mxu0 %v236
        %480 = vmatprep.subr.mxu0 0.0
        %481 = vmatpush1.msra.mxu0 %v237
        %482 = vmatprep.subr.mxu0 0.0
        %483 = vmatpush1.msra.mxu0 %v238
        %484 = vmatprep.subr.mxu0 0.0
        %485 = vmatpush1.msra.mxu0 %v239
        %486 = vmatprep.mubr.f32.mxu0 %v419
        %487 = vmatmul.mubr.f32.gmra.mrb[0].mxu0 %v415
        %v488 = vpop.f32.mrb[0].mxu0
        %v489 = vadd.f32 0.0, %v488
        %v490 = vpop.f32.mrb[0].mxu0
        %491 = vdwg.mxu0
        %s492 = scalar_lea.vmem [#allocation2], 2
        %493 = vst.msk [vmem:[%s492] sm:$0x1] %vm322, %v489
        %s494 = scalar_lea.vmem %s207, 6
        %v495 = vld [vmem:[%s494] sm:$0x3]
        %v497 = vlaneseq
        %v498 = vshrl.u32 %v497, 7
        %v499 = vsub.s32 0, %v498
        %v500 = vrot.slane %v495, %v499
        %v501 = vlaneseq
        %v502 = vshrl.u32 %v501, 7
        %v503 = vsub.s32 1, %v502
        %v504 = vrot.slane %v495, %v503
        %507 = vmatprep.subr.mxu0 0.0
        %508 = vmatpush1.msra.mxu0 %v208
        %509 = vmatprep.subr.mxu0 0.0
        %510 = vmatpush1.msra.mxu0 %v209
        %511 = vmatprep.subr.mxu0 0.0
        %512 = vmatpush1.msra.mxu0 %v210
        %513 = vmatprep.subr.mxu0 0.0
        %514 = vmatpush1.msra.mxu0 %v211
        %515 = vmatprep.subr.mxu0 0.0
        %516 = vmatpush1.msra.mxu0 %v212
        %517 = vmatprep.subr.mxu0 0.0
        %518 = vmatpush1.msra.mxu0 %v213
        %519 = vmatprep.subr.mxu0 0.0
        %520 = vmatpush1.msra.mxu0 %v214
        %521 = vmatprep.subr.mxu0 0.0
        %522 = vmatpush1.msra.mxu0 %v215
        %523 = vmatprep.subr.mxu0 0.0
        %524 = vmatpush1.msra.mxu0 %v216
        %525 = vmatprep.subr.mxu0 0.0
        %526 = vmatpush1.msra.mxu0 %v217
        %527 = vmatprep.subr.mxu0 0.0
        %528 = vmatpush1.msra.mxu0 %v218
        %529 = vmatprep.subr.mxu0 0.0
        %530 = vmatpush1.msra.mxu0 %v219
        %531 = vmatprep.subr.mxu0 0.0
        %532 = vmatpush1.msra.mxu0 %v220
        %533 = vmatprep.subr.mxu0 0.0
        %534 = vmatpush1.msra.mxu0 %v221
        %535 = vmatprep.subr.mxu0 0.0
        %536 = vmatpush1.msra.mxu0 %v222
        %537 = vmatprep.subr.mxu0 0.0
        %538 = vmatpush1.msra.mxu0 %v223
        %539 = vmatprep.subr.mxu0 0.0
        %540 = vmatpush1.msra.mxu0 %v224
        %541 = vmatprep.subr.mxu0 0.0
        %542 = vmatpush1.msra.mxu0 %v225
        %543 = vmatprep.subr.mxu0 0.0
        %544 = vmatpush1.msra.mxu0 %v226
        %545 = vmatprep.subr.mxu0 0.0
        %546 = vmatpush1.msra.mxu0 %v227
        %547 = vmatprep.subr.mxu0 0.0
        %548 = vmatpush1.msra.mxu0 %v228
        %549 = vmatprep.subr.mxu0 0.0
        %550 = vmatpush1.msra.mxu0 %v229
        %551 = vmatprep.subr.mxu0 0.0
        %552 = vmatpush1.msra.mxu0 %v230
        %553 = vmatprep.subr.mxu0 0.0
        %554 = vmatpush1.msra.mxu0 %v231
        %555 = vmatprep.subr.mxu0 0.0
        %556 = vmatpush1.msra.mxu0 %v232
        %557 = vmatprep.subr.mxu0 0.0
        %558 = vmatpush1.msra.mxu0 %v233
        %559 = vmatprep.subr.mxu0 0.0
        %560 = vmatpush1.msra.mxu0 %v234
        %561 = vmatprep.subr.mxu0 0.0
        %562 = vmatpush1.msra.mxu0 %v235
        %563 = vmatprep.subr.mxu0 0.0
        %564 = vmatpush1.msra.mxu0 %v236
        %565 = vmatprep.subr.mxu0 0.0
        %566 = vmatpush1.msra.mxu0 %v237
        %567 = vmatprep.subr.mxu0 0.0
        %568 = vmatpush1.msra.mxu0 %v238
        %569 = vmatprep.subr.mxu0 0.0
        %570 = vmatpush1.msra.mxu0 %v239
        %571 = vmatprep.mubr.f32.mxu0 %v504
        %572 = vmatmul.mubr.f32.gmra.mrb[0].mxu0 %v500
        %v573 = vpop.f32.mrb[0].mxu0
        %v574 = vadd.f32 0.0, %v573
        %v575 = vpop.f32.mrb[0].mxu0
        %576 = vdwg.mxu0
        %s577 = scalar_lea.vmem [#allocation2], 3
        %578 = vst.msk [vmem:[%s577] sm:$0x1] %vm322, %v574
        %s579 = sld [smem:[#allocation3]]
        %v580 = vld [vmem:[#allocation2] sm:$0x1]
        %v581 = vstv %s579
        %v582 = vmul.f32 %v581, %v580
        %s583 = sld [smem:[#allocation3 + $0x1]]
        %v584 = vld [vmem:[%s407] sm:$0x1]
        %v585 = vstv %s583
        %v586 = vmul.f32 %v585, %v584
        %v587 = vadd.f32 %v582, %v586
        %s588 = sld [smem:[#allocation3 + $0x2]]
        %v589 = vld [vmem:[%s492] sm:$0x1]
        %v590 = vstv %s588
        %v591 = vmul.f32 %v590, %v589
        %v592 = vadd.f32 %v587, %v591
        %s593 = sld [smem:[#allocation3 + $0x3]]
        %v594 = vld [vmem:[%s577] sm:$0x1]
        %v595 = vstv %s593
        %v596 = vmul.f32 %v595, %v594
        %v597 = vadd.f32 %v592, %v596
        %598 = vst.msk [vmem:[%s199] sm:$0x1] %vm322, %v597
        %s599 = sld [smem:[#allocation3 + $0x80]]
        %v600 = vld [vmem:[#allocation2] sm:$0x1]
        %v601 = vstv %s599
        %v602 = vmul.f32 %v601, %v600
        %s603 = sld [smem:[#allocation3 + $0x81]]
        %v604 = vld [vmem:[%s407] sm:$0x1]
        %v605 = vstv %s603
        %v606 = vmul.f32 %v605, %v604
        %v607 = vadd.f32 %v602, %v606
        %s608 = sld [smem:[#allocation3 + $0x82]]
        %v609 = vld [vmem:[%s492] sm:$0x1]
        %v610 = vstv %s608
        %v611 = vmul.f32 %v610, %v609
        %v612 = vadd.f32 %v607, %v611
        %s613 = sld [smem:[#allocation3 + $0x83]]
        %v614 = vld [vmem:[%s577] sm:$0x1]
        %v615 = vstv %s613
        %v616 = vmul.f32 %v615, %v614
        %v617 = vadd.f32 %v612, %v616
        %s618 = scalar_lea.vmem %s199, 1 [#allocation6]
        %619 = vst.msk [vmem:[%s618] sm:$0x1] %vm322, %v617
        %s620 = sld [smem:[#allocation3 + $0x100]]
        %v621 = vld [vmem:[#allocation2] sm:$0x1]
        %v622 = vstv %s620
        %v623 = vmul.f32 %v622, %v621
        %s624 = sld [smem:[#allocation3 + $0x101]]
        %v625 = vld [vmem:[%s407] sm:$0x1]
        %v626 = vstv %s624
        %v627 = vmul.f32 %v626, %v625
        %v628 = vadd.f32 %v623, %v627
        %s629 = sld [smem:[#allocation3 + $0x102]]
        %v630 = vld [vmem:[%s492] sm:$0x1]
        %v631 = vstv %s629
        %v632 = vmul.f32 %v631, %v630
        %v633 = vadd.f32 %v628, %v632
        %s634 = sld [smem:[#allocation3 + $0x103]]
        %v635 = vld [vmem:[%s577] sm:$0x1]
        %v636 = vstv %s634
        %v637 = vmul.f32 %v636, %v635
        %v638 = vadd.f32 %v633, %v637
        %s639 = scalar_lea.vmem %s199, 2 [#allocation6]
        %640 = vst.msk [vmem:[%s639] sm:$0x1] %vm322, %v638
        %s641 = sld [smem:[#allocation3 + $0x180]]
        %v642 = vld [vmem:[#allocation2] sm:$0x1]
        %v643 = vstv %s641
        %v644 = vmul.f32 %v643, %v642
        %s645 = sld [smem:[#allocation3 + $0x181]]
        %v646 = vld [vmem:[%s407] sm:$0x1]
        %v647 = vstv %s645
        %v648 = vmul.f32 %v647, %v646
        %v649 = vadd.f32 %v644, %v648
        %s650 = sld [smem:[#allocation3 + $0x182]]
        %v651 = vld [vmem:[%s492] sm:$0x1]
        %v652 = vstv %s650
        %v653 = vmul.f32 %v652, %v651
        %v654 = vadd.f32 %v649, %v653
        %s655 = sld [smem:[#allocation3 + $0x183]]
        %v656 = vld [vmem:[%s577] sm:$0x1]
        %v657 = vstv %s655
        %v658 = vmul.f32 %v657, %v656
        %v659 = vadd.f32 %v654, %v658
        %s660 = scalar_lea.vmem %s199, 3 [#allocation6]
        %661 = vst.msk [vmem:[%s660] sm:$0x1] %vm322, %v659
        %s662 = sld [smem:[#allocation3 + $0x200]]
        %v663 = vld [vmem:[#allocation2] sm:$0x1]
        %v664 = vstv %s662
        %v665 = vmul.f32 %v664, %v663
        %s666 = sld [smem:[#allocation3 + $0x201]]
        %v667 = vld [vmem:[%s407] sm:$0x1]
        %v668 = vstv %s666
        %v669 = vmul.f32 %v668, %v667
        %v670 = vadd.f32 %v665, %v669
        %s671 = sld [smem:[#allocation3 + $0x202]]
        %v672 = vld [vmem:[%s492] sm:$0x1]
        %v673 = vstv %s671
        %v674 = vmul.f32 %v673, %v672
        %v675 = vadd.f32 %v670, %v674
        %s676 = sld [smem:[#allocation3 + $0x203]]
        %v677 = vld [vmem:[%s577] sm:$0x1]
        %v678 = vstv %s676
        %v679 = vmul.f32 %v678, %v677
        %v680 = vadd.f32 %v675, %v679
        %s681 = scalar_lea.vmem %s199, 4 [#allocation6]
        %682 = vst.msk [vmem:[%s681] sm:$0x1] %vm322, %v680
        %s683 = sld [smem:[#allocation3 + $0x280]]
        %v684 = vld [vmem:[#allocation2] sm:$0x1]
        %v685 = vstv %s683
        %v686 = vmul.f32 %v685, %v684
        %s687 = sld [smem:[#allocation3 + $0x281]]
        %v688 = vld [vmem:[%s407] sm:$0x1]
        %v689 = vstv %s687
        %v690 = vmul.f32 %v689, %v688
        %v691 = vadd.f32 %v686, %v690
        %s692 = sld [smem:[#allocation3 + $0x282]]
        %v693 = vld [vmem:[%s492] sm:$0x1]
        %v694 = vstv %s692
        %v695 = vmul.f32 %v694, %v693
        %v696 = vadd.f32 %v691, %v695
        %s697 = sld [smem:[#allocation3 + $0x283]]
        %v698 = vld [vmem:[%s577] sm:$0x1]
        %v699 = vstv %s697
        %v700 = vmul.f32 %v699, %v698
        %v701 = vadd.f32 %v696, %v700
        %s702 = scalar_lea.vmem %s199, 5 [#allocation6]
        %703 = vst.msk [vmem:[%s702] sm:$0x1] %vm322, %v701
        %s704 = sld [smem:[#allocation3 + $0x300]]
        %v705 = vld [vmem:[#allocation2] sm:$0x1]
        %v706 = vstv %s704
        %v707 = vmul.f32 %v706, %v705
        %s708 = sld [smem:[#allocation3 + $0x301]]
        %v709 = vld [vmem:[%s407] sm:$0x1]
        %v710 = vstv %s708
        %v711 = vmul.f32 %v710, %v709
        %v712 = vadd.f32 %v707, %v711
        %s713 = sld [smem:[#allocation3 + $0x302]]
        %v714 = vld [vmem:[%s492] sm:$0x1]
        %v715 = vstv %s713
        %v716 = vmul.f32 %v715, %v714
        %v717 = vadd.f32 %v712, %v716
        %s718 = sld [smem:[#allocation3 + $0x303]]
        %v719 = vld [vmem:[%s577] sm:$0x1]
        %v720 = vstv %s718
        %v721 = vmul.f32 %v720, %v719
        %v722 = vadd.f32 %v717, %v721
        %s723 = scalar_lea.vmem %s199, 6 [#allocation6]
        %724 = vst.msk [vmem:[%s723] sm:$0x1] %vm322, %v722
        %s725 = sld [smem:[#allocation3 + $0x380]]
        %v726 = vld [vmem:[#allocation2] sm:$0x1]
        %v727 = vstv %s725
        %v728 = vmul.f32 %v727, %v726
        %s729 = sld [smem:[#allocation3 + $0x381]]
        %v730 = vld [vmem:[%s407] sm:$0x1]
        %v731 = vstv %s729
        %v732 = vmul.f32 %v731, %v730
        %v733 = vadd.f32 %v728, %v732
        %s734 = sld [smem:[#allocation3 + $0x382]]
        %v735 = vld [vmem:[%s492] sm:$0x1]
        %v736 = vstv %s734
        %v737 = vmul.f32 %v736, %v735
        %v738 = vadd.f32 %v733, %v737
        %s739 = sld [smem:[#allocation3 + $0x383]]
        %v740 = vld [vmem:[%s577] sm:$0x1]
        %v741 = vstv %s739
        %v742 = vmul.f32 %v741, %v740
        %v743 = vadd.f32 %v738, %v742
        %s744 = scalar_lea.vmem %s199, 7 [#allocation6]
        %745 = vst.msk [vmem:[%s744] sm:$0x1] %vm322, %v743
        %s746 = sand.u32 %s110, 1
        %s747 = scalar_lea.sflag [#allocation4], %s746
        %s748 = sand.u32 %s110, 1
        %s749 = smul.addr %s748, 8
        %s750 = scalar_lea.vmem [#allocation6], %s749
        // Predicated region
        $region37: #{tpu_custom_call.1} parent=31 // pred_check
          %p751 = pneg %p120
        $region38: #{tpu_custom_call.1} parent=31 // pred_check_branch
          %753 = sbr.rel (%p751) target = $region40
        $region39: #{tpu_custom_call.1} parent=31 // pred_region
          %s755 = ssub.s32 128, 128
          %756 = vsyncadd %s747, %s755
          %s757 = smul.addr %s22, 8
          %s758 = sadd.s32 %s23, %s757
          %s759 = smul.addr %s758, 16
          %s760 = scalar_lea.hbm %s3, %s759
          %s761 = sshll.u32 %s750, 4
          %s762 = int_to_ptr.vmem [resolvable:$true] %s761
          %767 = dma.vmem_to_hbm [thread:$0]  %s762, 128, %s760, %s747, 16, 16, 1
        $region40: #{tpu_custom_call.1} parent=31 // pred_fallthru
          _
      $region32: #{tpu_custom_call.1} parent=5 // pred_fallthru
        _
      %p768 = scmp.le.s32.totalorder 2, %s13
      // Predicated region
      $region41: #{tpu_custom_call.1} parent=5 // pred_check
        %p769 = pneg %p768
      $region42: #{tpu_custom_call.1} parent=5 // pred_check_branch
        %771 = sbr.rel (%p769) target = $region44
      $region43: #{tpu_custom_call.1} parent=5 // pred_region
        %s772 = ssub.s32 %s13, 2
        // Predicated region
        $region45: #{tpu_custom_call.1} parent=43 // pred_check
          %p773 = pneg %p126
        $region46: #{tpu_custom_call.1} parent=43 // pred_check_branch
          %775 = sbr.rel (%p773) target = $region48
        $region47: #{tpu_custom_call.1} parent=43 // pred_region
          %s776 = sand.u32 %s111, 1
          %s777 = scalar_lea.sflag [#allocation4], %s776
          %s778 = sand.u32 %s111, 1
          %s779 = smul.addr %s778, 8
          %s780 = scalar_lea.vmem [#allocation6], %s779
          %781 = dma.done %s777, 128
        $region48: #{tpu_custom_call.1} parent=43 // pred_fallthru
          _
      $region44: #{tpu_custom_call.1} parent=5 // pred_fallthru
        _
    $region6: #{tpu_custom_call.1} parent=1 // loop_footer
      %s17 = sadd.s32 1, %s13
    $region7: #{tpu_custom_call.1} parent=1 // loop_footer_branch
      %12 = sbr.rel target = $region3
    $region8: #{tpu_custom_call.1} parent=1 // loop_exit
      _
    %782 = vsyncpa [#allocation4], 1
    %s783 = scalar_lea.sflag [#allocation4], 1
    %784 = vsyncpa %s783, 1
    %785 = vsyncpa [#allocation5], 1
    %s786 = scalar_lea.sflag [#allocation5], 1
    %787 = vsyncpa %s786, 1

</llo_original>
